<compile_context>
chip_gen: v6e
topology: v6e:2x2x1
jax: 0.10.0
libtpu: 0.0.40
codegen_flags: <defaults>
</compile_context>

<pallas_src>
import jax
import jax.numpy as jnp
from jax.experimental import pallas as pl
from jax.experimental.pallas import tpu as pltpu


def _se_scale_kernel(xse_ref, w_ref, b_ref, x_ref, o_ref):
    # Per-tile 1x1 conv on a (1,1) spatial input:
    #   (c_tile, Cin) * (1, Cin) -> lane-reduce -> (c_tile, 1), plus bias.
    # VPU multiply + XLU reduce; avoids MXU latency for this tiny K=20, N=1 dot.
    s = jnp.sum(
        w_ref[...].astype(jnp.float32) * xse_ref[...].astype(jnp.float32),
        axis=1, keepdims=True,
    ) + b_ref[...].astype(jnp.float32)
    s = jax.nn.sigmoid(s)                                    # (c_tile, 1), EUP
    # lane-broadcast multiply over all spatial positions of this channel tile,
    # done in the feature-map dtype (keeps bf16 native on v6e/v7x).
    o_ref[...] = (x_ref[...] * s.astype(x_ref.dtype)).astype(o_ref.dtype)


def _sublane_pack(dtype) -> int:
    """Sublane packing granularity for a dtype (8 f32, 16 bf16, 32 int8/fp8)."""
    itemsize = jnp.dtype(dtype).itemsize
    return 8 * max(1, 4 // itemsize)


def se_scale(x_se_nchw, weight_oihw, bias, x_nchw, *, donate_x=False):
    """x_se_nchw: (1, Cin, 1, 1); weight: (Cout, Cin, 1, 1); bias: (Cout,);
    x_nchw: (1, Cout, H, W). Returns (1, Cout, H, W)."""
    n, cin, _, _ = x_se_nchw.shape
    _, cout, H, W = x_nchw.shape
    assert n == 1 and x_nchw.shape[0] == 1
    hw = H * W

    # channel-major layout: all of these are free reshapes (no transposes)
    xse = x_se_nchw.reshape(1, cin)          # (1, Cin)   -- lane-dense row
    w = weight_oihw.reshape(cout, cin)       # (Cout, Cin)  -- native torch layout
    b = bias.reshape(cout, 1)                # (Cout, 1)
    x = x_nchw.reshape(cout, hw)             # (Cout, HW)

    # Tile selection: prefer 2 grid steps (double-buffered, one per v7x TC);
    # c_tile must be a multiple of the dtype's sublane packing.
    pack = _sublane_pack(x_nchw.dtype)
    if cout % (2 * pack) == 0:
        n_blocks = 2
    elif cout % pack == 0:
        n_blocks = 1
    else:
        n_blocks = 1  # fall back to one full-extent block
    c_tile = cout // n_blocks

    bytes_x = cout * hw * jnp.dtype(x_nchw.dtype).itemsize
    cost = pl.CostEstimate(
        flops=2 * cout * cin + cout * hw,
        transcendentals=cout,
        bytes_accessed=2 * bytes_x
        + (cout * cin + cout + cin) * jnp.dtype(weight_oihw.dtype).itemsize,
    )

    out = pl.pallas_call(
        _se_scale_kernel,
        out_shape=jax.ShapeDtypeStruct((cout, hw), x_nchw.dtype),
        grid=(n_blocks,),
        in_specs=[
            pl.BlockSpec((1, cin), lambda i: (0, 0)),        # SE vector (shared)
            pl.BlockSpec((c_tile, cin), lambda i: (i, 0)),   # weight rows for this tile
            pl.BlockSpec((c_tile, 1), lambda i: (i, 0)),     # bias rows for this tile
            pl.BlockSpec((c_tile, hw), lambda i: (i, 0)),    # feature-map tile
        ],
        out_specs=pl.BlockSpec((c_tile, hw), lambda i: (i, 0)),
        compiler_params=pltpu.CompilerParams(
            dimension_semantics=("parallel",)),
        cost_estimate=cost,
        input_output_aliases=({3: 0} if donate_x else {}),
    )(xse, w, b, x)

    return out.reshape(1, cout, H, W)


if __name__ == "__main__":
    key = jax.random.PRNGKey(0)
    k1, k2, k3, k4 = jax.random.split(key, 4)

    Cin, Cout, H, W = 20, 480, 28, 28

    # deterministic synthetic parameters (shapes match Conv2d(20, 480, kernel_size=1))
    weight = jax.random.normal(k1, (Cout, Cin, 1, 1), dtype=jnp.float32) * 0.1
    bias = jax.random.normal(k2, (Cout,), dtype=jnp.float32) * 0.1

    # inputs matching the module's forward signature
    x266 = jax.random.normal(k3, (1, Cin, 1, 1), dtype=jnp.float32)   # SE vector
    x263 = jax.random.normal(k4, (1, Cout, H, W), dtype=jnp.float32)  # feature map

    out = se_scale(x266, weight, bias, x263)
    out = jax.block_until_ready(out)

    # reference (plain JAX) for a sanity check
    s_ref = jax.nn.sigmoid(
        (x266.reshape(1, Cin) @ weight.reshape(Cout, Cin).T + bias).reshape(1, Cout, 1, 1)
    )
    ref = s_ref * x263
    assert out.shape == (1, Cout, H, W)
    assert jnp.allclose(out, ref, atol=1e-5, rtol=1e-5)

    print("KERNEL_OK")
</pallas_src>

<mosaic_0001>
module attributes {stable_mosaic.version = 11 : i64} {
  func.func @_se_scale_kernel(%arg0: i32, %arg1: memref<1x20xf32, #tpu.memory_space<vmem>>, %arg2: memref<240x20xf32, #tpu.memory_space<vmem>>, %arg3: memref<240x1xf32, #tpu.memory_space<vmem>>, %arg4: memref<240x784xf32, #tpu.memory_space<vmem>>, %arg5: memref<240x784xf32, #tpu.memory_space<vmem>>) attributes {dimension_semantics = [#tpu.dimension_semantics<parallel>], iteration_bounds = array<i64: 2>, scalar_prefetch = 0 : i64, scratch_operands = 0 : i64, tpu.core_type = #tpu.core_type<tc>, window_params = [{pipeline_mode = #tpu.pipeline_mode<synchronous>, transform_indices = @transform_0, window_bounds = array<i64: 1, 20>}, {transform_indices = @transform_1, window_bounds = array<i64: 240, 20>}, {transform_indices = @transform_2, window_bounds = array<i64: 240, 1>}, {transform_indices = @transform_3, window_bounds = array<i64: 240, 784>}, {transform_indices = @transform_4, window_bounds = array<i64: 240, 784>}]} {
    %c0 = arith.constant 0 : index
    %c0_0 = arith.constant 0 : index
    %0 = vector.load %arg2[%c0, %c0_0] : memref<240x20xf32, #tpu.memory_space<vmem>>, vector<240x20xf32>
    %c0_1 = arith.constant 0 : index
    %c0_2 = arith.constant 0 : index
    %1 = vector.load %arg1[%c0_1, %c0_2] : memref<1x20xf32, #tpu.memory_space<vmem>>, vector<1x20xf32>
    %2 = vector.broadcast %1 : vector<1x20xf32> to vector<240x20xf32>
    %3 = arith.mulf %0, %2 : vector<240x20xf32>
    %cst = arith.constant dense<0.000000e+00> : vector<240xf32>
    %4 = vector.multi_reduction <add>, %3, %cst [1] : vector<240x20xf32> to vector<240xf32>
    %5 = vector.shape_cast %4 : vector<240xf32> to vector<240x1xf32>
    %c0_3 = arith.constant 0 : index
    %c0_4 = arith.constant 0 : index
    %6 = vector.load %arg3[%c0_3, %c0_4] : memref<240x1xf32, #tpu.memory_space<vmem>>, vector<240x1xf32>
    %7 = arith.addf %5, %6 : vector<240x1xf32>
    %8 = arith.negf %7 : vector<240x1xf32>
    %9 = math.exp %8 : vector<240x1xf32>
    %cst_5 = arith.constant 1.000000e+00 : f32
    %10 = vector.broadcast %cst_5 : f32 to vector<240x1xf32>
    %11 = arith.addf %10, %9 : vector<240x1xf32>
    %12 = arith.divf %10, %11 : vector<240x1xf32>
    %c0_6 = arith.constant 0 : index
    %c0_7 = arith.constant 0 : index
    %13 = vector.load %arg4[%c0_6, %c0_7] : memref<240x784xf32, #tpu.memory_space<vmem>>, vector<240x784xf32>
    %14 = vector.broadcast %12 : vector<240x1xf32> to vector<240x784xf32>
    %15 = arith.mulf %13, %14 : vector<240x784xf32>
    %c0_8 = arith.constant 0 : index
    %c0_9 = arith.constant 0 : index
    %16 = vector.load %arg5[%c0_8, %c0_9] : memref<240x784xf32, #tpu.memory_space<vmem>>, vector<240x784xf32>
    tpu.vector_store %arg5[%c0_8, %c0_9], %15 {strides = array<i32>} : memref<240x784xf32, #tpu.memory_space<vmem>>, vector<240x784xf32>,
    return
  }
  func.func @transform_0(%arg0: i32) -> (i32, i32) {
    %c0_i32 = arith.constant 0 : i32
    %c0_i32_0 = arith.constant 0 : i32
    %c0_i32_1 = arith.constant 0 : i32
    return %c0_i32, %c0_i32_0 : i32, i32
  }
  func.func @transform_1(%arg0: i32) -> (i32, i32) {
    %c0_i32 = arith.constant 0 : i32
    %c0_i32_0 = arith.constant 0 : i32
    return %arg0, %c0_i32 : i32, i32
  }
  func.func @transform_2(%arg0: i32) -> (i32, i32) {
    %c0_i32 = arith.constant 0 : i32
    %c0_i32_0 = arith.constant 0 : i32
    return %arg0, %c0_i32 : i32, i32
  }
  func.func @transform_3(%arg0: i32) -> (i32, i32) {
    %c0_i32 = arith.constant 0 : i32
    %c0_i32_0 = arith.constant 0 : i32
    return %arg0, %c0_i32 : i32, i32
  }
  func.func @transform_4(%arg0: i32) -> (i32, i32) {
    %c0_i32 = arith.constant 0 : i32
    %c0_i32_0 = arith.constant 0 : i32
    return %arg0, %c0_i32 : i32, i32
  }
}

</mosaic_0001>

<llo_original>
// kernel: tpu_custom_call.1
$region0: #{tpu_custom_call.1}
  #allocation0 [shape = 'u32[]', space=smem, size = 0x4, offset = 0x4, fixed_abs, tag = 'smem constant byte address 0x4 - core index']
  #allocation1 [shape = 'u32[144,128]{1,0:T(1,128)}', space=vmem, size = 0x12000, scoped, tag = 'internal scratch']
  %s0 = inlined_call_operand.vmem [shape: f32[1,20], index: 0, kind: input, shape index: {}]
  %s1 = inlined_call_operand.vmem [shape: f32[480,20], index: 1, kind: input, shape index: {}]
  %s2 = inlined_call_operand.vmem [shape: f32[480,1], index: 2, kind: input, shape index: {}]
  %s3 = inlined_call_operand.vmem [shape: f32[480,784], index: 3, kind: input, shape index: {}]
  %s4 = inlined_call_operand.vmem [shape: f32[480,784], index: 4, kind: output, shape index: {}]
  %s5 = sld [smem:[#allocation0]]
  $region49: #{tpu_custom_call.1} parent=0
    _
  %s7 = ssub.s32 1, %s5
  %s8 = scalar_select 0, %s7, %s5
  loop: start=0, step=1, limit=4
  $region2: #{tpu_custom_call.1} parent=0 // loop_pre_header
    _
  $region3: #{tpu_custom_call.1} parent=0 // loop_header
    %s10 = sphi 0, %s14
    %p11 = scmp.ge.s32.totalorder %s10, 4
    %s18 = sphi 0, %s18
    %s20 = sphi 0, %s18
    %s21 = sphi 0, %s20
    %s35 = sphi 0, %s21
    %s41 = sphi 0, %s43
    %s44 = sphi 0, %s41
    %s45 = sphi 0, %s44
    %s61 = sphi 0, %s45
    %s67 = sphi 0, %s69
    %s70 = sphi 0, %s67
    %s71 = sphi 0, %s70
    %s87 = sphi 0, %s71
    %s93 = sphi 0, %s95
    %s96 = sphi 0, %s93
    %s97 = sphi 0, %s96
    %s113 = sphi 0, %s97
    %s119 = sphi 0, %s121
    %s122 = sphi 0, %s119
    %s123 = sphi 0, %s122
    %s139 = sphi 0, %s123
  $region4: #{tpu_custom_call.1} parent=0 // loop_header_branch
    %13 = sbr.rel (%p11) target = $region8
  $region5: #{tpu_custom_call.1} parent=0 // loop_body
    %s15 = ssub.s32 %s10, 1
    %s16 = ssub.s32 %s10, 2
    %s17 = sadd.s32 %s10, 1
    %s19 = sadd.s32 %s18, 1
    %p22 = scmp.eq.s32.totalorder %s10, 1
    %p23 = scmp.ne.s32.totalorder %s18, %s20
    %p24 = scmp.eq.s32.totalorder %s10, 0
    %p25 = por %p23, %p24
    %p26 = scmp.ne.s32.totalorder %s18, %s20
    %p27 = scmp.eq.s32.totalorder %s15, 1
    %p28 = por %p26, %p27
    %p29 = scmp.ne.s32.totalorder %s20, %s21
    %p30 = scmp.eq.s32.totalorder %s15, 0
    %p31 = por %p29, %p30
    %p32 = scmp.ne.s32.totalorder %s20, %s21
    %p33 = scmp.eq.s32.totalorder %s16, 1
    %p34 = por %p32, %p33
    %p36 = scmp.ne.s32.totalorder %s21, %s35
    %p37 = scmp.eq.s32.totalorder %s16, 0
    %p38 = por %p36, %p37
    %s39 = ssub.s32 %s10, %s17
    %p40 = scmp.eq.s32.totalorder %s39, 0
    %s42 = sadd.s32 %s41, 1
    %s43 = scalar_select %p40, %s41, %s42
    %p46 = pneg %p40
    %p47 = scmp.eq.s32.totalorder %s10, 1
    %p48 = por %p46, %p47
    %p49 = scmp.ne.s32.totalorder %s41, %s44
    %p50 = scmp.eq.s32.totalorder %s10, 0
    %p51 = por %p49, %p50
    %p52 = scmp.ne.s32.totalorder %s41, %s44
    %p53 = scmp.eq.s32.totalorder %s15, 1
    %p54 = por %p52, %p53
    %p55 = scmp.ne.s32.totalorder %s44, %s45
    %p56 = scmp.eq.s32.totalorder %s15, 0
    %p57 = por %p55, %p56
    %p58 = scmp.ne.s32.totalorder %s44, %s45
    %p59 = scmp.eq.s32.totalorder %s16, 1
    %p60 = por %p58, %p59
    %p62 = scmp.ne.s32.totalorder %s45, %s61
    %p63 = scmp.eq.s32.totalorder %s16, 0
    %p64 = por %p62, %p63
    %s65 = ssub.s32 %s10, %s17
    %p66 = scmp.eq.s32.totalorder %s65, 0
    %s68 = sadd.s32 %s67, 1
    %s69 = scalar_select %p66, %s67, %s68
    %p72 = pneg %p66
    %p73 = scmp.eq.s32.totalorder %s10, 1
    %p74 = por %p72, %p73
    %p75 = scmp.ne.s32.totalorder %s67, %s70
    %p76 = scmp.eq.s32.totalorder %s10, 0
    %p77 = por %p75, %p76
    %p78 = scmp.ne.s32.totalorder %s67, %s70
    %p79 = scmp.eq.s32.totalorder %s15, 1
    %p80 = por %p78, %p79
    %p81 = scmp.ne.s32.totalorder %s70, %s71
    %p82 = scmp.eq.s32.totalorder %s15, 0
    %p83 = por %p81, %p82
    %p84 = scmp.ne.s32.totalorder %s70, %s71
    %p85 = scmp.eq.s32.totalorder %s16, 1
    %p86 = por %p84, %p85
    %p88 = scmp.ne.s32.totalorder %s71, %s87
    %p89 = scmp.eq.s32.totalorder %s16, 0
    %p90 = por %p88, %p89
    %s91 = ssub.s32 %s10, %s17
    %p92 = scmp.eq.s32.totalorder %s91, 0
    %s94 = sadd.s32 %s93, 1
    %s95 = scalar_select %p92, %s93, %s94
    %p98 = pneg %p92
    %p99 = scmp.eq.s32.totalorder %s10, 1
    %p100 = por %p98, %p99
    %p101 = scmp.ne.s32.totalorder %s93, %s96
    %p102 = scmp.eq.s32.totalorder %s10, 0
    %p103 = por %p101, %p102
    %p104 = scmp.ne.s32.totalorder %s93, %s96
    %p105 = scmp.eq.s32.totalorder %s15, 1
    %p106 = por %p104, %p105
    %p107 = scmp.ne.s32.totalorder %s96, %s97
    %p108 = scmp.eq.s32.totalorder %s15, 0
    %p109 = por %p107, %p108
    %p110 = scmp.ne.s32.totalorder %s96, %s97
    %p111 = scmp.eq.s32.totalorder %s16, 1
    %p112 = por %p110, %p111
    %p114 = scmp.ne.s32.totalorder %s97, %s113
    %p115 = scmp.eq.s32.totalorder %s16, 0
    %p116 = por %p114, %p115
    %s117 = ssub.s32 %s10, %s17
    %p118 = scmp.eq.s32.totalorder %s117, 0
    %s120 = sadd.s32 %s119, 1
    %s121 = scalar_select %p118, %s119, %s120
    %p124 = pneg %p118
    %p125 = scmp.eq.s32.totalorder %s10, 1
    %p126 = por %p124, %p125
    %p127 = scmp.ne.s32.totalorder %s119, %s122
    %p128 = scmp.eq.s32.totalorder %s10, 0
    %p129 = por %p127, %p128
    %p130 = scmp.ne.s32.totalorder %s119, %s122
    %p131 = scmp.eq.s32.totalorder %s15, 1
    %p132 = por %p130, %p131
    %p133 = scmp.ne.s32.totalorder %s122, %s123
    %p134 = scmp.eq.s32.totalorder %s15, 0
    %p135 = por %p133, %p134
    %p136 = scmp.ne.s32.totalorder %s122, %s123
    %p137 = scmp.eq.s32.totalorder %s16, 1
    %p138 = por %p136, %p137
    %p140 = scmp.ne.s32.totalorder %s123, %s139
    %p141 = scmp.eq.s32.totalorder %s16, 0
    %p142 = por %p140, %p141
    %p143 = scmp.le.s32.totalorder 1, %s10
    %p144 = scmp.lt.s32.totalorder %s10, 3
    %p145 = pnand %p143, %p144
    %p146 = pneg %p145
    // Predicated region
    $region9: #{tpu_custom_call.1} parent=5 // pred_check
      _
    $region10: #{tpu_custom_call.1} parent=5 // pred_check_branch
      %148 = sbr.rel (%p145) target = $region12
    $region11: #{tpu_custom_call.1} parent=5 // pred_region
      %s149 = ssub.s32 %s10, 1
      // Predicated region
      $region13: #{tpu_custom_call.1} parent=11 // pred_check
        %p150 = pneg %p31
      $region14: #{tpu_custom_call.1} parent=11 // pred_check_branch
        %152 = sbr.rel (%p150) target = $region16
      $region15: #{tpu_custom_call.1} parent=11 // pred_region
        _
      $region16: #{tpu_custom_call.1} parent=11 // pred_fallthru
        _
    $region12: #{tpu_custom_call.1} parent=5 // pred_fallthru
      _
    %p153 = scmp.lt.s32.totalorder %s10, 2
    // Predicated region
    $region17: #{tpu_custom_call.1} parent=5 // pred_check
      %p154 = pneg %p153
    $region18: #{tpu_custom_call.1} parent=5 // pred_check_branch
      %156 = sbr.rel (%p154) target = $region20
    $region19: #{tpu_custom_call.1} parent=5 // pred_region
      // Predicated region
      $region21: #{tpu_custom_call.1} parent=19 // pred_check
        %p157 = pneg %p51
      $region22: #{tpu_custom_call.1} parent=19 // pred_check_branch
        %159 = sbr.rel (%p157) target = $region24
      $region23: #{tpu_custom_call.1} parent=19 // pred_region
        %s160 = smul.u32 30, %s10
        %p161 = scmp.lt.s32.totalorder %s160, 59
        %s162 = scalar_select %p161, %s160, 59
        %s163 = smul.addr %s162, 8
        %s164 = scalar_lea.vmem %s1, %s163
        %s165 = smul.u32 30, %s10
      $region24: #{tpu_custom_call.1} parent=19 // pred_fallthru
        _
      // Predicated region
      $region25: #{tpu_custom_call.1} parent=19 // pred_check
        %p166 = pneg %p77
      $region26: #{tpu_custom_call.1} parent=19 // pred_check_branch
        %168 = sbr.rel (%p166) target = $region28
      $region27: #{tpu_custom_call.1} parent=19 // pred_region
        %s169 = smul.u32 30, %s10
        %p170 = scmp.lt.s32.totalorder %s169, 59
        %s171 = scalar_select %p170, %s169, 59
        %s172 = smul.addr %s171, 8
        %s173 = scalar_lea.vmem %s2, %s172
        %s174 = smul.u32 30, %s10
      $region28: #{tpu_custom_call.1} parent=19 // pred_fallthru
        _
      // Predicated region
      $region29: #{tpu_custom_call.1} parent=19 // pred_check
        %p175 = pneg %p103
      $region30: #{tpu_custom_call.1} parent=19 // pred_check_branch
        %177 = sbr.rel (%p175) target = $region32
      $region31: #{tpu_custom_call.1} parent=19 // pred_region
        %s178 = smul.u32 30, %s10
        %p179 = scmp.lt.s32.totalorder %s178, 59
        %s180 = scalar_select %p179, %s178, 59
        %s181 = smul.addr %s180, 7
        %s182 = smul.addr %s181, 8
        %s183 = scalar_lea.vmem %s3, %s182
        %s184 = smul.u32 30, %s10
      $region32: #{tpu_custom_call.1} parent=19 // pred_fallthru
        _
    $region20: #{tpu_custom_call.1} parent=5 // pred_fallthru
      _
    %p185 = scmp.le.s32.totalorder 1, %s10
    %p186 = scmp.lt.s32.totalorder %s10, 3
    %p187 = pnand %p185, %p186
    %p188 = pneg %p187
    // Predicated region
    $region33: #{tpu_custom_call.1} parent=5 // pred_check
      _
    $region34: #{tpu_custom_call.1} parent=5 // pred_check_branch
      %190 = sbr.rel (%p187) target = $region36
    $region35: #{tpu_custom_call.1} parent=5 // pred_region
      %s191 = ssub.s32 %s10, 1
      %p192 = pneg %p31
      %p193 = pneg %p28
      %s194 = smul.u32 30, %s15
      %p195 = scmp.lt.s32.totalorder %s194, 59
      %s196 = scalar_select %p195, %s194, 59
      %s197 = smul.addr %s196, 8
      %s198 = scalar_lea.vmem %s1, %s197
      %p199 = pneg %p57
      %p200 = pneg %p54
      %s201 = smul.u32 30, %s15
      %p202 = scmp.lt.s32.totalorder %s201, 59
      %s203 = scalar_select %p202, %s201, 59
      %s204 = smul.addr %s203, 8
      %s205 = scalar_lea.vmem %s2, %s204
      %p206 = pneg %p83
      %p207 = pneg %p80
      %s208 = smul.u32 30, %s15
      %p209 = scmp.lt.s32.totalorder %s208, 59
      %s210 = scalar_select %p209, %s208, 59
      %s211 = smul.addr %s210, 7
      %s212 = smul.addr %s211, 8
      %s213 = scalar_lea.vmem %s3, %s212
      %p214 = pneg %p109
      %p215 = pneg %p106
      %p216 = pneg %p135
      %p217 = pneg %p132
      %s218 = smul.u32 30, %s15
      %p219 = scmp.lt.s32.totalorder %s218, 59
      %s220 = scalar_select %p219, %s218, 59
      %s221 = smul.addr %s220, 7
      %s222 = smul.addr %s221, 8
      %s223 = scalar_lea.vmem %s4, %s222
      %s224 = smul.u32 30, %s15
      %p225 = scmp.lt.s32.totalorder %s224, 59
      %s226 = scalar_select %p225, %s224, 59
      %s227 = smul.addr %s226, 8
      %s228 = scalar_lea.vmem %s1, %s227
      %s229 = smul.u32 30, %s15
      %s230 = smul.u32 30, %s15
      %p231 = scmp.lt.s32.totalorder %s230, 59
      %s232 = scalar_select %p231, %s230, 59
      %s233 = smul.addr %s232, 8
      %s234 = scalar_lea.vmem %s2, %s233
      %s235 = smul.u32 30, %s15
      %s236 = smul.u32 30, %s15
      %p237 = scmp.lt.s32.totalorder %s236, 59
      %s238 = scalar_select %p237, %s236, 59
      %s239 = smul.addr %s238, 7
      %s240 = smul.addr %s239, 8
      %s241 = scalar_lea.vmem %s3, %s240
      %s242 = smul.u32 30, %s15
      %s243 = smul.u32 30, %s15
      %p244 = scmp.lt.s32.totalorder %s243, 59
      %s245 = scalar_select %p244, %s243, 59
      %s246 = smul.addr %s245, 7
      %s247 = smul.addr %s246, 8
      %s248 = scalar_lea.vmem %s4, %s247
      %s249 = smul.u32 30, %s15
      %v250 = vld [vmem:[%s228] sm:$0xff]
      %v251 = vld [vmem:[%s228 + $0x8] sm:$0xff]
      %v252 = vld [vmem:[%s228 + $0x10] sm:$0xff]
      %v253 = vld [vmem:[%s228 + $0x18] sm:$0xff]
      %v254 = vld [vmem:[%s228 + $0x20] sm:$0xff]
      %v255 = vld [vmem:[%s228 + $0x28] sm:$0xff]
      %v256 = vld [vmem:[%s228 + $0x30] sm:$0xff]
      %v257 = vld [vmem:[%s228 + $0x38] sm:$0xff]
      %v258 = vld [vmem:[%s228 + $0x40] sm:$0xff]
      %v259 = vld [vmem:[%s228 + $0x48] sm:$0xff]
      %v260 = vld [vmem:[%s228 + $0x50] sm:$0xff]
      %v261 = vld [vmem:[%s228 + $0x58] sm:$0xff]
      %v262 = vld [vmem:[%s228 + $0x60] sm:$0xff]
      %v263 = vld [vmem:[%s228 + $0x68] sm:$0xff]
      %v264 = vld [vmem:[%s228 + $0x70] sm:$0xff]
      %v265 = vld [vmem:[%s228 + $0x78] sm:$0xff]
      %v266 = vld [vmem:[%s228 + $0x80] sm:$0xff]
      %v267 = vld [vmem:[%s228 + $0x88] sm:$0xff]
      %v268 = vld [vmem:[%s228 + $0x90] sm:$0xff]
      %v269 = vld [vmem:[%s228 + $0x98] sm:$0xff]
      %v270 = vld [vmem:[%s228 + $0xa0] sm:$0xff]
      %v271 = vld [vmem:[%s228 + $0xa8] sm:$0xff]
      %v272 = vld [vmem:[%s228 + $0xb0] sm:$0xff]
      %v273 = vld [vmem:[%s228 + $0xb8] sm:$0xff]
      %v274 = vld [vmem:[%s228 + $0xc0] sm:$0xff]
      %v275 = vld [vmem:[%s228 + $0xc8] sm:$0xff]
      %v276 = vld [vmem:[%s228 + $0xd0] sm:$0xff]
      %v277 = vld [vmem:[%s228 + $0xd8] sm:$0xff]
      %v278 = vld [vmem:[%s228 + $0xe0] sm:$0xff]
      %v279 = vld [vmem:[%s228 + $0xe8] sm:$0xff]
      %v280 = vld [vmem:[%s0] sm:$0x1]
      %v282 = vlaneseq
      %v283 = vshrl.u32 %v282, 7
      %v284 = vsub.s32 0, %v283
      %v285 = vrot.slane %v280, %v284
      %v287 = vmul.f32 %v250, %v285
      %v288 = vmul.f32 %v251, %v285
      %v289 = vmul.f32 %v252, %v285
      %v290 = vmul.f32 %v253, %v285
      %v291 = vmul.f32 %v254, %v285
      %v292 = vmul.f32 %v255, %v285
      %v293 = vmul.f32 %v256, %v285
      %v294 = vmul.f32 %v257, %v285
      %v295 = vmul.f32 %v258, %v285
      %v296 = vmul.f32 %v259, %v285
      %v297 = vmul.f32 %v260, %v285
      %v298 = vmul.f32 %v261, %v285
      %v299 = vmul.f32 %v262, %v285
      %v300 = vmul.f32 %v263, %v285
      %v301 = vmul.f32 %v264, %v285
      %v302 = vmul.f32 %v265, %v285
      %v303 = vmul.f32 %v266, %v285
      %v304 = vmul.f32 %v267, %v285
      %v305 = vmul.f32 %v268, %v285
      %v306 = vmul.f32 %v269, %v285
      %v307 = vmul.f32 %v270, %v285
      %v308 = vmul.f32 %v271, %v285
      %v309 = vmul.f32 %v272, %v285
      %v310 = vmul.f32 %v273, %v285
      %v311 = vmul.f32 %v274, %v285
      %v312 = vmul.f32 %v275, %v285
      %v313 = vmul.f32 %v276, %v285
      %v314 = vmul.f32 %v277, %v285
      %v315 = vmul.f32 %v278, %v285
      %v316 = vmul.f32 %v279, %v285
      %vm317 = vcmask 162816
      %v318 = vsel %vm317, %v287, 0.0
      %319 = vadd.xlane.f32.xlu0 %v318
      %v320 = vpop.xlane.xlu0 %319
      %v321 = vsel %vm317, %v288, 0.0
      %322 = vadd.xlane.f32.xlu0 %v321
      %v323 = vpop.xlane.xlu0 %322
      %v324 = vsel %vm317, %v289, 0.0
      %325 = vadd.xlane.f32.xlu0 %v324
      %v326 = vpop.xlane.xlu0 %325
      %v327 = vsel %vm317, %v290, 0.0
      %328 = vadd.xlane.f32.xlu0 %v327
      %v329 = vpop.xlane.xlu0 %328
      %v330 = vsel %vm317, %v291, 0.0
      %331 = vadd.xlane.f32.xlu0 %v330
      %v332 = vpop.xlane.xlu0 %331
      %v333 = vsel %vm317, %v292, 0.0
      %334 = vadd.xlane.f32.xlu0 %v333
      %v335 = vpop.xlane.xlu0 %334
      %v336 = vsel %vm317, %v293, 0.0
      %337 = vadd.xlane.f32.xlu0 %v336
      %v338 = vpop.xlane.xlu0 %337
      %v339 = vsel %vm317, %v294, 0.0
      %340 = vadd.xlane.f32.xlu0 %v339
      %v341 = vpop.xlane.xlu0 %340
      %v342 = vsel %vm317, %v295, 0.0
      %343 = vadd.xlane.f32.xlu0 %v342
      %v344 = vpop.xlane.xlu0 %343
      %v345 = vsel %vm317, %v296, 0.0
      %346 = vadd.xlane.f32.xlu0 %v345
      %v347 = vpop.xlane.xlu0 %346
      %v348 = vsel %vm317, %v297, 0.0
      %349 = vadd.xlane.f32.xlu0 %v348
      %v350 = vpop.xlane.xlu0 %349
      %v351 = vsel %vm317, %v298, 0.0
      %352 = vadd.xlane.f32.xlu0 %v351
      %v353 = vpop.xlane.xlu0 %352
      %v354 = vsel %vm317, %v299, 0.0
      %355 = vadd.xlane.f32.xlu0 %v354
      %v356 = vpop.xlane.xlu0 %355
      %v357 = vsel %vm317, %v300, 0.0
      %358 = vadd.xlane.f32.xlu0 %v357
      %v359 = vpop.xlane.xlu0 %358
      %v360 = vsel %vm317, %v301, 0.0
      %361 = vadd.xlane.f32.xlu0 %v360
      %v362 = vpop.xlane.xlu0 %361
      %v363 = vsel %vm317, %v302, 0.0
      %364 = vadd.xlane.f32.xlu0 %v363
      %v365 = vpop.xlane.xlu0 %364
      %v366 = vsel %vm317, %v303, 0.0
      %367 = vadd.xlane.f32.xlu0 %v366
      %v368 = vpop.xlane.xlu0 %367
      %v369 = vsel %vm317, %v304, 0.0
      %370 = vadd.xlane.f32.xlu0 %v369
      %v371 = vpop.xlane.xlu0 %370
      %v372 = vsel %vm317, %v305, 0.0
      %373 = vadd.xlane.f32.xlu0 %v372
      %v374 = vpop.xlane.xlu0 %373
      %v375 = vsel %vm317, %v306, 0.0
      %376 = vadd.xlane.f32.xlu0 %v375
      %v377 = vpop.xlane.xlu0 %376
      %v378 = vsel %vm317, %v307, 0.0
      %379 = vadd.xlane.f32.xlu0 %v378
      %v380 = vpop.xlane.xlu0 %379
      %v381 = vsel %vm317, %v308, 0.0
      %382 = vadd.xlane.f32.xlu0 %v381
      %v383 = vpop.xlane.xlu0 %382
      %v384 = vsel %vm317, %v309, 0.0
      %385 = vadd.xlane.f32.xlu0 %v384
      %v386 = vpop.xlane.xlu0 %385
      %v387 = vsel %vm317, %v310, 0.0
      %388 = vadd.xlane.f32.xlu0 %v387
      %v389 = vpop.xlane.xlu0 %388
      %v390 = vsel %vm317, %v311, 0.0
      %391 = vadd.xlane.f32.xlu0 %v390
      %v392 = vpop.xlane.xlu0 %391
      %v393 = vsel %vm317, %v312, 0.0
      %394 = vadd.xlane.f32.xlu0 %v393
      %v395 = vpop.xlane.xlu0 %394
      %v396 = vsel %vm317, %v313, 0.0
      %397 = vadd.xlane.f32.xlu0 %v396
      %v398 = vpop.xlane.xlu0 %397
      %v399 = vsel %vm317, %v314, 0.0
      %400 = vadd.xlane.f32.xlu0 %v399
      %v401 = vpop.xlane.xlu0 %400
      %v402 = vsel %vm317, %v315, 0.0
      %403 = vadd.xlane.f32.xlu0 %v402
      %v404 = vpop.xlane.xlu0 %403
      %v405 = vsel %vm317, %v316, 0.0
      %406 = vadd.xlane.f32.xlu0 %v405
      %v407 = vpop.xlane.xlu0 %406
      %v408 = vld [vmem:[%s234] sm:$0xff]
      %v409 = vld [vmem:[%s234 + $0x8] sm:$0xff]
      %v410 = vld [vmem:[%s234 + $0x10] sm:$0xff]
      %v411 = vld [vmem:[%s234 + $0x18] sm:$0xff]
      %v412 = vld [vmem:[%s234 + $0x20] sm:$0xff]
      %v413 = vld [vmem:[%s234 + $0x28] sm:$0xff]
      %v414 = vld [vmem:[%s234 + $0x30] sm:$0xff]
      %v415 = vld [vmem:[%s234 + $0x38] sm:$0xff]
      %v416 = vld [vmem:[%s234 + $0x40] sm:$0xff]
      %v417 = vld [vmem:[%s234 + $0x48] sm:$0xff]
      %v418 = vld [vmem:[%s234 + $0x50] sm:$0xff]
      %v419 = vld [vmem:[%s234 + $0x58] sm:$0xff]
      %v420 = vld [vmem:[%s234 + $0x60] sm:$0xff]
      %v421 = vld [vmem:[%s234 + $0x68] sm:$0xff]
      %v422 = vld [vmem:[%s234 + $0x70] sm:$0xff]
      %v423 = vld [vmem:[%s234 + $0x78] sm:$0xff]
      %v424 = vld [vmem:[%s234 + $0x80] sm:$0xff]
      %v425 = vld [vmem:[%s234 + $0x88] sm:$0xff]
      %v426 = vld [vmem:[%s234 + $0x90] sm:$0xff]
      %v427 = vld [vmem:[%s234 + $0x98] sm:$0xff]
      %v428 = vld [vmem:[%s234 + $0xa0] sm:$0xff]
      %v429 = vld [vmem:[%s234 + $0xa8] sm:$0xff]
      %v430 = vld [vmem:[%s234 + $0xb0] sm:$0xff]
      %v431 = vld [vmem:[%s234 + $0xb8] sm:$0xff]
      %v432 = vld [vmem:[%s234 + $0xc0] sm:$0xff]
      %v433 = vld [vmem:[%s234 + $0xc8] sm:$0xff]
      %v434 = vld [vmem:[%s234 + $0xd0] sm:$0xff]
      %v435 = vld [vmem:[%s234 + $0xd8] sm:$0xff]
      %v436 = vld [vmem:[%s234 + $0xe0] sm:$0xff]
      %v437 = vld [vmem:[%s234 + $0xe8] sm:$0xff]
      %v438 = vadd.f32 %v320, %v408
      %v439 = vadd.f32 %v323, %v409
      %v440 = vadd.f32 %v326, %v410
      %v441 = vadd.f32 %v329, %v411
      %v442 = vadd.f32 %v332, %v412
      %v443 = vadd.f32 %v335, %v413
      %v444 = vadd.f32 %v338, %v414
      %v445 = vadd.f32 %v341, %v415
      %v446 = vadd.f32 %v344, %v416
      %v447 = vadd.f32 %v347, %v417
      %v448 = vadd.f32 %v350, %v418
      %v449 = vadd.f32 %v353, %v419
      %v450 = vadd.f32 %v356, %v420
      %v451 = vadd.f32 %v359, %v421
      %v452 = vadd.f32 %v362, %v422
      %v453 = vadd.f32 %v365, %v423
      %v454 = vadd.f32 %v368, %v424
      %v455 = vadd.f32 %v371, %v425
      %v456 = vadd.f32 %v374, %v426
      %v457 = vadd.f32 %v377, %v427
      %v458 = vadd.f32 %v380, %v428
      %v459 = vadd.f32 %v383, %v429
      %v460 = vadd.f32 %v386, %v430
      %v461 = vadd.f32 %v389, %v431
      %v462 = vadd.f32 %v392, %v432
      %v463 = vadd.f32 %v395, %v433
      %v464 = vadd.f32 %v398, %v434
      %v465 = vadd.f32 %v401, %v435
      %v466 = vadd.f32 %v404, %v436
      %v467 = vadd.f32 %v407, %v437
      %v468 = vxor.u32 %v438, 2147483648
      %v469 = vxor.u32 %v439, 2147483648
      %v470 = vxor.u32 %v440, 2147483648
      %v471 = vxor.u32 %v441, 2147483648
      %v472 = vxor.u32 %v442, 2147483648
      %v473 = vxor.u32 %v443, 2147483648
      %v474 = vxor.u32 %v444, 2147483648
      %v475 = vxor.u32 %v445, 2147483648
      %v476 = vxor.u32 %v446, 2147483648
      %v477 = vxor.u32 %v447, 2147483648
      %v478 = vxor.u32 %v448, 2147483648
      %v479 = vxor.u32 %v449, 2147483648
      %v480 = vxor.u32 %v450, 2147483648
      %v481 = vxor.u32 %v451, 2147483648
      %v482 = vxor.u32 %v452, 2147483648
      %v483 = vxor.u32 %v453, 2147483648
      %v484 = vxor.u32 %v454, 2147483648
      %v485 = vxor.u32 %v455, 2147483648
      %v486 = vxor.u32 %v456, 2147483648
      %v487 = vxor.u32 %v457, 2147483648
      %v488 = vxor.u32 %v458, 2147483648
      %v489 = vxor.u32 %v459, 2147483648
      %v490 = vxor.u32 %v460, 2147483648
      %v491 = vxor.u32 %v461, 2147483648
      %v492 = vxor.u32 %v462, 2147483648
      %v493 = vxor.u32 %v463, 2147483648
      %v494 = vxor.u32 %v464, 2147483648
      %v495 = vxor.u32 %v465, 2147483648
      %v496 = vxor.u32 %v466, 2147483648
      %v497 = vxor.u32 %v467, 2147483648
      %v498 = vmul.f32 %v468, 1.442695
      %v499 = vpow.pop %v498
      %v500 = vmul.f32 %v469, 1.442695
      %v501 = vpow.pop %v500
      %v502 = vmul.f32 %v470, 1.442695
      %v503 = vpow.pop %v502
      %v504 = vmul.f32 %v471, 1.442695
      %v505 = vpow.pop %v504
      %v506 = vmul.f32 %v472, 1.442695
      %v507 = vpow.pop %v506
      %v508 = vmul.f32 %v473, 1.442695
      %v509 = vpow.pop %v508
      %v510 = vmul.f32 %v474, 1.442695
      %v511 = vpow.pop %v510
      %v512 = vmul.f32 %v475, 1.442695
      %v513 = vpow.pop %v512
      %v514 = vmul.f32 %v476, 1.442695
      %v515 = vpow.pop %v514
      %v516 = vmul.f32 %v477, 1.442695
      %v517 = vpow.pop %v516
      %v518 = vmul.f32 %v478, 1.442695
      %v519 = vpow.pop %v518
      %v520 = vmul.f32 %v479, 1.442695
      %v521 = vpow.pop %v520
      %v522 = vmul.f32 %v480, 1.442695
      %v523 = vpow.pop %v522
      %v524 = vmul.f32 %v481, 1.442695
      %v525 = vpow.pop %v524
      %v526 = vmul.f32 %v482, 1.442695
      %v527 = vpow.pop %v526
      %v528 = vmul.f32 %v483, 1.442695
      %v529 = vpow.pop %v528
      %v530 = vmul.f32 %v484, 1.442695
      %v531 = vpow.pop %v530
      %v532 = vmul.f32 %v485, 1.442695
      %v533 = vpow.pop %v532
      %v534 = vmul.f32 %v486, 1.442695
      %v535 = vpow.pop %v534
      %v536 = vmul.f32 %v487, 1.442695
      %v537 = vpow.pop %v536
      %v538 = vmul.f32 %v488, 1.442695
      %v539 = vpow.pop %v538
      %v540 = vmul.f32 %v489, 1.442695
      %v541 = vpow.pop %v540
      %v542 = vmul.f32 %v490, 1.442695
      %v543 = vpow.pop %v542
      %v544 = vmul.f32 %v491, 1.442695
      %v545 = vpow.pop %v544
      %v546 = vmul.f32 %v492, 1.442695
      %v547 = vpow.pop %v546
      %v548 = vmul.f32 %v493, 1.442695
      %v549 = vpow.pop %v548
      %v550 = vmul.f32 %v494, 1.442695
      %v551 = vpow.pop %v550
      %v552 = vmul.f32 %v495, 1.442695
      %v553 = vpow.pop %v552
      %v554 = vmul.f32 %v496, 1.442695
      %v555 = vpow.pop %v554
      %v556 = vmul.f32 %v497, 1.442695
      %v557 = vpow.pop %v556
      %v558 = vadd.f32 %v499, 1.0
      %v559 = vadd.f32 %v501, 1.0
      %v560 = vadd.f32 %v503, 1.0
      %v561 = vadd.f32 %v505, 1.0
      %v562 = vadd.f32 %v507, 1.0
      %v563 = vadd.f32 %v509, 1.0
      %v564 = vadd.f32 %v511, 1.0
      %v565 = vadd.f32 %v513, 1.0
      %v566 = vadd.f32 %v515, 1.0
      %v567 = vadd.f32 %v517, 1.0
      %v568 = vadd.f32 %v519, 1.0
      %v569 = vadd.f32 %v521, 1.0
      %v570 = vadd.f32 %v523, 1.0
      %v571 = vadd.f32 %v525, 1.0
      %v572 = vadd.f32 %v527, 1.0
      %v573 = vadd.f32 %v529, 1.0
      %v574 = vadd.f32 %v531, 1.0
      %v575 = vadd.f32 %v533, 1.0
      %v576 = vadd.f32 %v535, 1.0
      %v577 = vadd.f32 %v537, 1.0
      %v578 = vadd.f32 %v539, 1.0
      %v579 = vadd.f32 %v541, 1.0
      %v580 = vadd.f32 %v543, 1.0
      %v581 = vadd.f32 %v545, 1.0
      %v582 = vadd.f32 %v547, 1.0
      %v583 = vadd.f32 %v549, 1.0
      %v584 = vadd.f32 %v551, 1.0
      %v585 = vadd.f32 %v553, 1.0
      %v586 = vadd.f32 %v555, 1.0
      %v587 = vadd.f32 %v557, 1.0
      %v588 = vrcp.pop %v558
      %v589 = vmul.f32 1.0, %v588
      %v590 = vrcp.pop %v559
      %v591 = vmul.f32 1.0, %v590
      %v592 = vrcp.pop %v560
      %v593 = vmul.f32 1.0, %v592
      %v594 = vrcp.pop %v561
      %v595 = vmul.f32 1.0, %v594
      %v596 = vrcp.pop %v562
      %v597 = vmul.f32 1.0, %v596
      %v598 = vrcp.pop %v563
      %v599 = vmul.f32 1.0, %v598
      %v600 = vrcp.pop %v564
      %v601 = vmul.f32 1.0, %v600
      %v602 = vrcp.pop %v565
      %v603 = vmul.f32 1.0, %v602
      %v604 = vrcp.pop %v566
      %v605 = vmul.f32 1.0, %v604
      %v606 = vrcp.pop %v567
      %v607 = vmul.f32 1.0, %v606
      %v608 = vrcp.pop %v568
      %v609 = vmul.f32 1.0, %v608
      %v610 = vrcp.pop %v569
      %v611 = vmul.f32 1.0, %v610
      %v612 = vrcp.pop %v570
      %v613 = vmul.f32 1.0, %v612
      %v614 = vrcp.pop %v571
      %v615 = vmul.f32 1.0, %v614
      %v616 = vrcp.pop %v572
      %v617 = vmul.f32 1.0, %v616
      %v618 = vrcp.pop %v573
      %v619 = vmul.f32 1.0, %v618
      %v620 = vrcp.pop %v574
      %v621 = vmul.f32 1.0, %v620
      %v622 = vrcp.pop %v575
      %v623 = vmul.f32 1.0, %v622
      %v624 = vrcp.pop %v576
      %v625 = vmul.f32 1.0, %v624
      %v626 = vrcp.pop %v577
      %v627 = vmul.f32 1.0, %v626
      %v628 = vrcp.pop %v578
      %v629 = vmul.f32 1.0, %v628
      %v630 = vrcp.pop %v579
      %v631 = vmul.f32 1.0, %v630
      %v632 = vrcp.pop %v580
      %v633 = vmul.f32 1.0, %v632
      %v634 = vrcp.pop %v581
      %v635 = vmul.f32 1.0, %v634
      %v636 = vrcp.pop %v582
      %v637 = vmul.f32 1.0, %v636
      %v638 = vrcp.pop %v583
      %v639 = vmul.f32 1.0, %v638
      %v640 = vrcp.pop %v584
      %v641 = vmul.f32 1.0, %v640
      %v642 = vrcp.pop %v585
      %v643 = vmul.f32 1.0, %v642
      %v644 = vrcp.pop %v586
      %v645 = vmul.f32 1.0, %v644
      %v646 = vrcp.pop %v587
      %v647 = vmul.f32 1.0, %v646
      %v648 = vld [vmem:[%s241] sm:$0xff]
      %v649 = vld [vmem:[%s241 + $0x8] sm:$0xff]
      %v650 = vld [vmem:[%s241 + $0x10] sm:$0xff]
      %v651 = vld [vmem:[%s241 + $0x18] sm:$0xff]
      %v652 = vld [vmem:[%s241 + $0x20] sm:$0xff]
      %v653 = vld [vmem:[%s241 + $0x28] sm:$0xff]
      %v654 = vld [vmem:[%s241 + $0x30] sm:$0xff]
      %v655 = vld [vmem:[%s241 + $0x38] sm:$0xff]
      %v656 = vld [vmem:[%s241 + $0x40] sm:$0xff]
      %v657 = vld [vmem:[%s241 + $0x48] sm:$0xff]
      %v658 = vld [vmem:[%s241 + $0x50] sm:$0xff]
      %v659 = vld [vmem:[%s241 + $0x58] sm:$0xff]
      %v660 = vld [vmem:[%s241 + $0x60] sm:$0xff]
      %v661 = vld [vmem:[%s241 + $0x68] sm:$0xff]
      %v662 = vld [vmem:[%s241 + $0x70] sm:$0xff]
      %v663 = vld [vmem:[%s241 + $0x78] sm:$0xff]
      %v664 = vld [vmem:[%s241 + $0x80] sm:$0xff]
      %v665 = vld [vmem:[%s241 + $0x88] sm:$0xff]
      %v666 = vld [vmem:[%s241 + $0x90] sm:$0xff]
      %v667 = vld [vmem:[%s241 + $0x98] sm:$0xff]
      %v668 = vld [vmem:[%s241 + $0xa0] sm:$0xff]
      %v669 = vld [vmem:[%s241 + $0xa8] sm:$0xff]
      %v670 = vld [vmem:[%s241 + $0xb0] sm:$0xff]
      %v671 = vld [vmem:[%s241 + $0xb8] sm:$0xff]
      %v672 = vld [vmem:[%s241 + $0xc0] sm:$0xff]
      %v673 = vld [vmem:[%s241 + $0xc8] sm:$0xff]
      %v674 = vld [vmem:[%s241 + $0xd0] sm:$0xff]
      %v675 = vld [vmem:[%s241 + $0xd8] sm:$0xff]
      %v676 = vld [vmem:[%s241 + $0xe0] sm:$0xff]
      %v677 = vld [vmem:[%s241 + $0xe8] sm:$0xff]
      %v678 = vld [vmem:[%s241 + $0xf0] sm:$0xff]
      %v679 = vld [vmem:[%s241 + $0xf8] sm:$0xff]
      %v680 = vld [vmem:[%s241 + $0x100] sm:$0xff]
      %v681 = vld [vmem:[%s241 + $0x108] sm:$0xff]
      %v682 = vld [vmem:[%s241 + $0x110] sm:$0xff]
      %v683 = vld [vmem:[%s241 + $0x118] sm:$0xff]
      %v684 = vld [vmem:[%s241 + $0x120] sm:$0xff]
      %v685 = vld [vmem:[%s241 + $0x128] sm:$0xff]
      %v686 = vld [vmem:[%s241 + $0x130] sm:$0xff]
      %v687 = vld [vmem:[%s241 + $0x138] sm:$0xff]
      %v688 = vld [vmem:[%s241 + $0x140] sm:$0xff]
      %v689 = vld [vmem:[%s241 + $0x148] sm:$0xff]
      %v690 = vld [vmem:[%s241 + $0x150] sm:$0xff]
      %v691 = vld [vmem:[%s241 + $0x158] sm:$0xff]
      %v692 = vld [vmem:[%s241 + $0x160] sm:$0xff]
      %v693 = vld [vmem:[%s241 + $0x168] sm:$0xff]
      %v694 = vld [vmem:[%s241 + $0x170] sm:$0xff]
      %v695 = vld [vmem:[%s241 + $0x178] sm:$0xff]
      %v696 = vld [vmem:[%s241 + $0x180] sm:$0xff]
      %v697 = vld [vmem:[%s241 + $0x188] sm:$0xff]
      %v698 = vld [vmem:[%s241 + $0x190] sm:$0xff]
      %v699 = vld [vmem:[%s241 + $0x198] sm:$0xff]
      %v700 = vld [vmem:[%s241 + $0x1a0] sm:$0xff]
      %v701 = vld [vmem:[%s241 + $0x1a8] sm:$0xff]
      %v702 = vld [vmem:[%s241 + $0x1b0] sm:$0xff]
      %v703 = vld [vmem:[%s241 + $0x1b8] sm:$0xff]
      %v704 = vld [vmem:[%s241 + $0x1c0] sm:$0xff]
      %v705 = vld [vmem:[%s241 + $0x1c8] sm:$0xff]
      %v706 = vld [vmem:[%s241 + $0x1d0] sm:$0xff]
      %v707 = vld [vmem:[%s241 + $0x1d8] sm:$0xff]
      %v708 = vld [vmem:[%s241 + $0x1e0] sm:$0xff]
      %v709 = vld [vmem:[%s241 + $0x1e8] sm:$0xff]
      %v710 = vld [vmem:[%s241 + $0x1f0] sm:$0xff]
      %v711 = vld [vmem:[%s241 + $0x1f8] sm:$0xff]
      %v712 = vld [vmem:[%s241 + $0x200] sm:$0xff]
      %v713 = vld [vmem:[%s241 + $0x208] sm:$0xff]
      %v714 = vld [vmem:[%s241 + $0x210] sm:$0xff]
      %v715 = vld [vmem:[%s241 + $0x218] sm:$0xff]
      %v716 = vld [vmem:[%s241 + $0x220] sm:$0xff]
      %v717 = vld [vmem:[%s241 + $0x228] sm:$0xff]
      %v718 = vld [vmem:[%s241 + $0x230] sm:$0xff]
      %v719 = vld [vmem:[%s241 + $0x238] sm:$0xff]
      %v720 = vld [vmem:[%s241 + $0x240] sm:$0xff]
      %v721 = vld [vmem:[%s241 + $0x248] sm:$0xff]
      %v722 = vld [vmem:[%s241 + $0x250] sm:$0xff]
      %v723 = vld [vmem:[%s241 + $0x258] sm:$0xff]
      %v724 = vld [vmem:[%s241 + $0x260] sm:$0xff]
      %v725 = vld [vmem:[%s241 + $0x268] sm:$0xff]
      %v726 = vld [vmem:[%s241 + $0x270] sm:$0xff]
      %v727 = vld [vmem:[%s241 + $0x278] sm:$0xff]
      %v728 = vld [vmem:[%s241 + $0x280] sm:$0xff]
      %v729 = vld [vmem:[%s241 + $0x288] sm:$0xff]
      %v730 = vld [vmem:[%s241 + $0x290] sm:$0xff]
      %v731 = vld [vmem:[%s241 + $0x298] sm:$0xff]
      %v732 = vld [vmem:[%s241 + $0x2a0] sm:$0xff]
      %v733 = vld [vmem:[%s241 + $0x2a8] sm:$0xff]
      %v734 = vld [vmem:[%s241 + $0x2b0] sm:$0xff]
      %v735 = vld [vmem:[%s241 + $0x2b8] sm:$0xff]
      %v736 = vld [vmem:[%s241 + $0x2c0] sm:$0xff]
      %v737 = vld [vmem:[%s241 + $0x2c8] sm:$0xff]
      %v738 = vld [vmem:[%s241 + $0x2d0] sm:$0xff]
      %v739 = vld [vmem:[%s241 + $0x2d8] sm:$0xff]
      %v740 = vld [vmem:[%s241 + $0x2e0] sm:$0xff]
      %v741 = vld [vmem:[%s241 + $0x2e8] sm:$0xff]
      %v742 = vld [vmem:[%s241 + $0x2f0] sm:$0xff]
      %v743 = vld [vmem:[%s241 + $0x2f8] sm:$0xff]
      %v744 = vld [vmem:[%s241 + $0x300] sm:$0xff]
      %v745 = vld [vmem:[%s241 + $0x308] sm:$0xff]
      %v746 = vld [vmem:[%s241 + $0x310] sm:$0xff]
      %v747 = vld [vmem:[%s241 + $0x318] sm:$0xff]
      %v748 = vld [vmem:[%s241 + $0x320] sm:$0xff]
      %v749 = vld [vmem:[%s241 + $0x328] sm:$0xff]
      %v750 = vld [vmem:[%s241 + $0x330] sm:$0xff]
      %v751 = vld [vmem:[%s241 + $0x338] sm:$0xff]
      %v752 = vld [vmem:[%s241 + $0x340] sm:$0xff]
      %v753 = vld [vmem:[%s241 + $0x348] sm:$0xff]
      %v754 = vld [vmem:[%s241 + $0x350] sm:$0xff]
      %v755 = vld [vmem:[%s241 + $0x358] sm:$0xff]
      %v756 = vld [vmem:[%s241 + $0x360] sm:$0xff]
      %v757 = vld [vmem:[%s241 + $0x368] sm:$0xff]
      %v758 = vld [vmem:[%s241 + $0x370] sm:$0xff]
      %v759 = vld [vmem:[%s241 + $0x378] sm:$0xff]
      %v760 = vld [vmem:[%s241 + $0x380] sm:$0xff]
      %v761 = vld [vmem:[%s241 + $0x388] sm:$0xff]
      %v762 = vld [vmem:[%s241 + $0x390] sm:$0xff]
      %v763 = vld [vmem:[%s241 + $0x398] sm:$0xff]
      %v764 = vld [vmem:[%s241 + $0x3a0] sm:$0xff]
      %v765 = vld [vmem:[%s241 + $0x3a8] sm:$0xff]
      %v766 = vld [vmem:[%s241 + $0x3b0] sm:$0xff]
      %v767 = vld [vmem:[%s241 + $0x3b8] sm:$0xff]
      %v768 = vld [vmem:[%s241 + $0x3c0] sm:$0xff]
      %v769 = vld [vmem:[%s241 + $0x3c8] sm:$0xff]
      %v770 = vld [vmem:[%s241 + $0x3d0] sm:$0xff]
      %v771 = vld [vmem:[%s241 + $0x3d8] sm:$0xff]
      %v772 = vld [vmem:[%s241 + $0x3e0] sm:$0xff]
      %v773 = vld [vmem:[%s241 + $0x3e8] sm:$0xff]
      %v774 = vld [vmem:[%s241 + $0x3f0] sm:$0xff]
      %v775 = vld [vmem:[%s241 + $0x3f8] sm:$0xff]
      %v776 = vld [vmem:[%s241 + $0x400] sm:$0xff]
      %v777 = vld [vmem:[%s241 + $0x408] sm:$0xff]
      %v778 = vld [vmem:[%s241 + $0x410] sm:$0xff]
      %v779 = vld [vmem:[%s241 + $0x418] sm:$0xff]
      %v780 = vld [vmem:[%s241 + $0x420] sm:$0xff]
      %v781 = vld [vmem:[%s241 + $0x428] sm:$0xff]
      %v782 = vld [vmem:[%s241 + $0x430] sm:$0xff]
      %v783 = vld [vmem:[%s241 + $0x438] sm:$0xff]
      %v784 = vld [vmem:[%s241 + $0x440] sm:$0xff]
      %v785 = vld [vmem:[%s241 + $0x448] sm:$0xff]
      %v786 = vld [vmem:[%s241 + $0x450] sm:$0xff]
      %v787 = vld [vmem:[%s241 + $0x458] sm:$0xff]
      %v788 = vld [vmem:[%s241 + $0x460] sm:$0xff]
      %v789 = vld [vmem:[%s241 + $0x468] sm:$0xff]
      %v790 = vld [vmem:[%s241 + $0x470] sm:$0xff]
      %v791 = vld [vmem:[%s241 + $0x478] sm:$0xff]
      %v792 = vld [vmem:[%s241 + $0x480] sm:$0xff]
      %v793 = vld [vmem:[%s241 + $0x488] sm:$0xff]
      %v794 = vld [vmem:[%s241 + $0x490] sm:$0xff]
      %v795 = vld [vmem:[%s241 + $0x498] sm:$0xff]
      %v796 = vld [vmem:[%s241 + $0x4a0] sm:$0xff]
      %v797 = vld [vmem:[%s241 + $0x4a8] sm:$0xff]
      %v798 = vld [vmem:[%s241 + $0x4b0] sm:$0xff]
      %v799 = vld [vmem:[%s241 + $0x4b8] sm:$0xff]
      %v800 = vld [vmem:[%s241 + $0x4c0] sm:$0xff]
      %v801 = vld [vmem:[%s241 + $0x4c8] sm:$0xff]
      %v802 = vld [vmem:[%s241 + $0x4d0] sm:$0xff]
      %v803 = vld [vmem:[%s241 + $0x4d8] sm:$0xff]
      %v804 = vld [vmem:[%s241 + $0x4e0] sm:$0xff]
      %v805 = vld [vmem:[%s241 + $0x4e8] sm:$0xff]
      %v806 = vld [vmem:[%s241 + $0x4f0] sm:$0xff]
      %v807 = vld [vmem:[%s241 + $0x4f8] sm:$0xff]
      %v808 = vld [vmem:[%s241 + $0x500] sm:$0xff]
      %v809 = vld [vmem:[%s241 + $0x508] sm:$0xff]
      %v810 = vld [vmem:[%s241 + $0x510] sm:$0xff]
      %v811 = vld [vmem:[%s241 + $0x518] sm:$0xff]
      %v812 = vld [vmem:[%s241 + $0x520] sm:$0xff]
      %v813 = vld [vmem:[%s241 + $0x528] sm:$0xff]
      %v814 = vld [vmem:[%s241 + $0x530] sm:$0xff]
      %v815 = vld [vmem:[%s241 + $0x538] sm:$0xff]
      %v816 = vld [vmem:[%s241 + $0x540] sm:$0xff]
      %v817 = vld [vmem:[%s241 + $0x548] sm:$0xff]
      %v818 = vld [vmem:[%s241 + $0x550] sm:$0xff]
      %v819 = vld [vmem:[%s241 + $0x558] sm:$0xff]
      %v820 = vld [vmem:[%s241 + $0x560] sm:$0xff]
      %v821 = vld [vmem:[%s241 + $0x568] sm:$0xff]
      %v822 = vld [vmem:[%s241 + $0x570] sm:$0xff]
      %v823 = vld [vmem:[%s241 + $0x578] sm:$0xff]
      %v824 = vld [vmem:[%s241 + $0x580] sm:$0xff]
      %v825 = vld [vmem:[%s241 + $0x588] sm:$0xff]
      %v826 = vld [vmem:[%s241 + $0x590] sm:$0xff]
      %v827 = vld [vmem:[%s241 + $0x598] sm:$0xff]
      %v828 = vld [vmem:[%s241 + $0x5a0] sm:$0xff]
      %v829 = vld [vmem:[%s241 + $0x5a8] sm:$0xff]
      %v830 = vld [vmem:[%s241 + $0x5b0] sm:$0xff]
      %v831 = vld [vmem:[%s241 + $0x5b8] sm:$0xff]
      %v832 = vld [vmem:[%s241 + $0x5c0] sm:$0xff]
      %v833 = vld [vmem:[%s241 + $0x5c8] sm:$0xff]
      %v834 = vld [vmem:[%s241 + $0x5d0] sm:$0xff]
      %v835 = vld [vmem:[%s241 + $0x5d8] sm:$0xff]
      %v836 = vld [vmem:[%s241 + $0x5e0] sm:$0xff]
      %v837 = vld [vmem:[%s241 + $0x5e8] sm:$0xff]
      %v838 = vld [vmem:[%s241 + $0x5f0] sm:$0xff]
      %v839 = vld [vmem:[%s241 + $0x5f8] sm:$0xff]
      %v840 = vld [vmem:[%s241 + $0x600] sm:$0xff]
      %v841 = vld [vmem:[%s241 + $0x608] sm:$0xff]
      %v842 = vld [vmem:[%s241 + $0x610] sm:$0xff]
      %v843 = vld [vmem:[%s241 + $0x618] sm:$0xff]
      %v844 = vld [vmem:[%s241 + $0x620] sm:$0xff]
      %v845 = vld [vmem:[%s241 + $0x628] sm:$0xff]
      %v846 = vld [vmem:[%s241 + $0x630] sm:$0xff]
      %v847 = vld [vmem:[%s241 + $0x638] sm:$0xff]
      %v848 = vld [vmem:[%s241 + $0x640] sm:$0xff]
      %v849 = vld [vmem:[%s241 + $0x648] sm:$0xff]
      %v850 = vld [vmem:[%s241 + $0x650] sm:$0xff]
      %v851 = vld [vmem:[%s241 + $0x658] sm:$0xff]
      %v852 = vld [vmem:[%s241 + $0x660] sm:$0xff]
      %v853 = vld [vmem:[%s241 + $0x668] sm:$0xff]
      %v854 = vld [vmem:[%s241 + $0x670] sm:$0xff]
      %v855 = vld [vmem:[%s241 + $0x678] sm:$0xff]
      %v856 = vld [vmem:[%s241 + $0x680] sm:$0xff]
      %v857 = vld [vmem:[%s241 + $0x688] sm:$0xff]
      %859 = vset.pattern.permute.xlu0 0
      %860 = vperm.xlu0 %859, %v589
      %v861 = vpop.permute.xlu0 %860
      %864 = vset.pattern.permute.xlu0 0
      %865 = vperm.xlu0 %864, %v591
      %v866 = vpop.permute.xlu0 %865
      %869 = vset.pattern.permute.xlu0 0
      %870 = vperm.xlu0 %869, %v593
      %v871 = vpop.permute.xlu0 %870
      %874 = vset.pattern.permute.xlu0 0
      %875 = vperm.xlu0 %874, %v595
      %v876 = vpop.permute.xlu0 %875
      %879 = vset.pattern.permute.xlu0 0
      %880 = vperm.xlu0 %879, %v597
      %v881 = vpop.permute.xlu0 %880
      %884 = vset.pattern.permute.xlu0 0
      %885 = vperm.xlu0 %884, %v599
      %v886 = vpop.permute.xlu0 %885
      %889 = vset.pattern.permute.xlu0 0
      %890 = vperm.xlu0 %889, %v601
      %v891 = vpop.permute.xlu0 %890
      %894 = vset.pattern.permute.xlu0 0
      %895 = vperm.xlu0 %894, %v603
      %v896 = vpop.permute.xlu0 %895
      %899 = vset.pattern.permute.xlu0 0
      %900 = vperm.xlu0 %899, %v605
      %v901 = vpop.permute.xlu0 %900
      %904 = vset.pattern.permute.xlu0 0
      %905 = vperm.xlu0 %904, %v607
      %v906 = vpop.permute.xlu0 %905
      %909 = vset.pattern.permute.xlu0 0
      %910 = vperm.xlu0 %909, %v609
      %v911 = vpop.permute.xlu0 %910
      %914 = vset.pattern.permute.xlu0 0
      %915 = vperm.xlu0 %914, %v611
      %v916 = vpop.permute.xlu0 %915
      %919 = vset.pattern.permute.xlu0 0
      %920 = vperm.xlu0 %919, %v613
      %v921 = vpop.permute.xlu0 %920
      %924 = vset.pattern.permute.xlu0 0
      %925 = vperm.xlu0 %924, %v615
      %v926 = vpop.permute.xlu0 %925
      %929 = vset.pattern.permute.xlu0 0
      %930 = vperm.xlu0 %929, %v617
      %v931 = vpop.permute.xlu0 %930
      %934 = vset.pattern.permute.xlu0 0
      %935 = vperm.xlu0 %934, %v619
      %v936 = vpop.permute.xlu0 %935
      %939 = vset.pattern.permute.xlu0 0
      %940 = vperm.xlu0 %939, %v621
      %v941 = vpop.permute.xlu0 %940
      %944 = vset.pattern.permute.xlu0 0
      %945 = vperm.xlu0 %944, %v623
      %v946 = vpop.permute.xlu0 %945
      %949 = vset.pattern.permute.xlu0 0
      %950 = vperm.xlu0 %949, %v625
      %v951 = vpop.permute.xlu0 %950
      %954 = vset.pattern.permute.xlu0 0
      %955 = vperm.xlu0 %954, %v627
      %v956 = vpop.permute.xlu0 %955
      %959 = vset.pattern.permute.xlu0 0
      %960 = vperm.xlu0 %959, %v629
      %v961 = vpop.permute.xlu0 %960
      %964 = vset.pattern.permute.xlu0 0
      %965 = vperm.xlu0 %964, %v631
      %v966 = vpop.permute.xlu0 %965
      %969 = vset.pattern.permute.xlu0 0
      %970 = vperm.xlu0 %969, %v633
      %v971 = vpop.permute.xlu0 %970
      %974 = vset.pattern.permute.xlu0 0
      %975 = vperm.xlu0 %974, %v635
      %v976 = vpop.permute.xlu0 %975
      %979 = vset.pattern.permute.xlu0 0
      %980 = vperm.xlu0 %979, %v637
      %v981 = vpop.permute.xlu0 %980
      %984 = vset.pattern.permute.xlu0 0
      %985 = vperm.xlu0 %984, %v639
      %v986 = vpop.permute.xlu0 %985
      %989 = vset.pattern.permute.xlu0 0
      %990 = vperm.xlu0 %989, %v641
      %v991 = vpop.permute.xlu0 %990
      %994 = vset.pattern.permute.xlu0 0
      %995 = vperm.xlu0 %994, %v643
      %v996 = vpop.permute.xlu0 %995
      %999 = vset.pattern.permute.xlu0 0
      %1000 = vperm.xlu0 %999, %v645
      %v1001 = vpop.permute.xlu0 %1000
      %1004 = vset.pattern.permute.xlu0 0
      %1005 = vperm.xlu0 %1004, %v647
      %v1006 = vpop.permute.xlu0 %1005
      %v1008 = vmul.f32 %v648, %v861
      %v1009 = vmul.f32 %v649, %v861
      %v1010 = vmul.f32 %v650, %v861
      %v1011 = vmul.f32 %v651, %v861
      %v1012 = vmul.f32 %v652, %v861
      %v1013 = vmul.f32 %v653, %v861
      %v1014 = vmul.f32 %v654, %v861
      %v1015 = vmul.f32 %v655, %v866
      %v1016 = vmul.f32 %v656, %v866
      %v1017 = vmul.f32 %v657, %v866
      %v1018 = vmul.f32 %v658, %v866
      %v1019 = vmul.f32 %v659, %v866
      %v1020 = vmul.f32 %v660, %v866
      %v1021 = vmul.f32 %v661, %v866
      %v1022 = vmul.f32 %v662, %v871
      %v1023 = vmul.f32 %v663, %v871
      %v1024 = vmul.f32 %v664, %v871
      %v1025 = vmul.f32 %v665, %v871
      %v1026 = vmul.f32 %v666, %v871
      %v1027 = vmul.f32 %v667, %v871
      %v1028 = vmul.f32 %v668, %v871
      %v1029 = vmul.f32 %v669, %v876
      %v1030 = vmul.f32 %v670, %v876
      %v1031 = vmul.f32 %v671, %v876
      %v1032 = vmul.f32 %v672, %v876
      %v1033 = vmul.f32 %v673, %v876
      %v1034 = vmul.f32 %v674, %v876
      %v1035 = vmul.f32 %v675, %v876
      %v1036 = vmul.f32 %v676, %v881
      %v1037 = vmul.f32 %v677, %v881
      %v1038 = vmul.f32 %v678, %v881
      %v1039 = vmul.f32 %v679, %v881
      %v1040 = vmul.f32 %v680, %v881
      %v1041 = vmul.f32 %v681, %v881
      %v1042 = vmul.f32 %v682, %v881
      %v1043 = vmul.f32 %v683, %v886
      %v1044 = vmul.f32 %v684, %v886
      %v1045 = vmul.f32 %v685, %v886
      %v1046 = vmul.f32 %v686, %v886
      %v1047 = vmul.f32 %v687, %v886
      %v1048 = vmul.f32 %v688, %v886
      %v1049 = vmul.f32 %v689, %v886
      %v1050 = vmul.f32 %v690, %v891
      %v1051 = vmul.f32 %v691, %v891
      %v1052 = vmul.f32 %v692, %v891
      %v1053 = vmul.f32 %v693, %v891
      %v1054 = vmul.f32 %v694, %v891
      %v1055 = vmul.f32 %v695, %v891
      %v1056 = vmul.f32 %v696, %v891
      %v1057 = vmul.f32 %v697, %v896
      %v1058 = vmul.f32 %v698, %v896
      %v1059 = vmul.f32 %v699, %v896
      %v1060 = vmul.f32 %v700, %v896
      %v1061 = vmul.f32 %v701, %v896
      %v1062 = vmul.f32 %v702, %v896
      %v1063 = vmul.f32 %v703, %v896
      %v1064 = vmul.f32 %v704, %v901
      %v1065 = vmul.f32 %v705, %v901
      %v1066 = vmul.f32 %v706, %v901
      %v1067 = vmul.f32 %v707, %v901
      %v1068 = vmul.f32 %v708, %v901
      %v1069 = vmul.f32 %v709, %v901
      %v1070 = vmul.f32 %v710, %v901
      %v1071 = vmul.f32 %v711, %v906
      %v1072 = vmul.f32 %v712, %v906
      %v1073 = vmul.f32 %v713, %v906
      %v1074 = vmul.f32 %v714, %v906
      %v1075 = vmul.f32 %v715, %v906
      %v1076 = vmul.f32 %v716, %v906
      %v1077 = vmul.f32 %v717, %v906
      %v1078 = vmul.f32 %v718, %v911
      %v1079 = vmul.f32 %v719, %v911
      %v1080 = vmul.f32 %v720, %v911
      %v1081 = vmul.f32 %v721, %v911
      %v1082 = vmul.f32 %v722, %v911
      %v1083 = vmul.f32 %v723, %v911
      %v1084 = vmul.f32 %v724, %v911
      %v1085 = vmul.f32 %v725, %v916
      %v1086 = vmul.f32 %v726, %v916
      %v1087 = vmul.f32 %v727, %v916
      %v1088 = vmul.f32 %v728, %v916
      %v1089 = vmul.f32 %v729, %v916
      %v1090 = vmul.f32 %v730, %v916
      %v1091 = vmul.f32 %v731, %v916
      %v1092 = vmul.f32 %v732, %v921
      %v1093 = vmul.f32 %v733, %v921
      %v1094 = vmul.f32 %v734, %v921
      %v1095 = vmul.f32 %v735, %v921
      %v1096 = vmul.f32 %v736, %v921
      %v1097 = vmul.f32 %v737, %v921
      %v1098 = vmul.f32 %v738, %v921
      %v1099 = vmul.f32 %v739, %v926
      %v1100 = vmul.f32 %v740, %v926
      %v1101 = vmul.f32 %v741, %v926
      %v1102 = vmul.f32 %v742, %v926
      %v1103 = vmul.f32 %v743, %v926
      %v1104 = vmul.f32 %v744, %v926
      %v1105 = vmul.f32 %v745, %v926
      %v1106 = vmul.f32 %v746, %v931
      %v1107 = vmul.f32 %v747, %v931
      %v1108 = vmul.f32 %v748, %v931
      %v1109 = vmul.f32 %v749, %v931
      %v1110 = vmul.f32 %v750, %v931
      %v1111 = vmul.f32 %v751, %v931
      %v1112 = vmul.f32 %v752, %v931
      %v1113 = vmul.f32 %v753, %v936
      %v1114 = vmul.f32 %v754, %v936
      %v1115 = vmul.f32 %v755, %v936
      %v1116 = vmul.f32 %v756, %v936
      %v1117 = vmul.f32 %v757, %v936
      %v1118 = vmul.f32 %v758, %v936
      %v1119 = vmul.f32 %v759, %v936
      %v1120 = vmul.f32 %v760, %v941
      %v1121 = vmul.f32 %v761, %v941
      %v1122 = vmul.f32 %v762, %v941
      %v1123 = vmul.f32 %v763, %v941
      %v1124 = vmul.f32 %v764, %v941
      %v1125 = vmul.f32 %v765, %v941
      %v1126 = vmul.f32 %v766, %v941
      %v1127 = vmul.f32 %v767, %v946
      %v1128 = vmul.f32 %v768, %v946
      %v1129 = vmul.f32 %v769, %v946
      %v1130 = vmul.f32 %v770, %v946
      %v1131 = vmul.f32 %v771, %v946
      %v1132 = vmul.f32 %v772, %v946
      %v1133 = vmul.f32 %v773, %v946
      %v1134 = vmul.f32 %v774, %v951
      %v1135 = vmul.f32 %v775, %v951
      %v1136 = vmul.f32 %v776, %v951
      %v1137 = vmul.f32 %v777, %v951
      %v1138 = vmul.f32 %v778, %v951
      %v1139 = vmul.f32 %v779, %v951
      %v1140 = vmul.f32 %v780, %v951
      %v1141 = vmul.f32 %v781, %v956
      %v1142 = vmul.f32 %v782, %v956
      %v1143 = vmul.f32 %v783, %v956
      %v1144 = vmul.f32 %v784, %v956
      %v1145 = vmul.f32 %v785, %v956
      %v1146 = vmul.f32 %v786, %v956
      %v1147 = vmul.f32 %v787, %v956
      %v1148 = vmul.f32 %v788, %v961
      %v1149 = vmul.f32 %v789, %v961
      %v1150 = vmul.f32 %v790, %v961
      %v1151 = vmul.f32 %v791, %v961
      %v1152 = vmul.f32 %v792, %v961
      %v1153 = vmul.f32 %v793, %v961
      %v1154 = vmul.f32 %v794, %v961
      %v1155 = vmul.f32 %v795, %v966
      %v1156 = vmul.f32 %v796, %v966
      %v1157 = vmul.f32 %v797, %v966
      %v1158 = vmul.f32 %v798, %v966
      %v1159 = vmul.f32 %v799, %v966
      %v1160 = vmul.f32 %v800, %v966
      %v1161 = vmul.f32 %v801, %v966
      %v1162 = vmul.f32 %v802, %v971
      %v1163 = vmul.f32 %v803, %v971
      %v1164 = vmul.f32 %v804, %v971
      %v1165 = vmul.f32 %v805, %v971
      %v1166 = vmul.f32 %v806, %v971
      %v1167 = vmul.f32 %v807, %v971
      %v1168 = vmul.f32 %v808, %v971
      %v1169 = vmul.f32 %v809, %v976
      %v1170 = vmul.f32 %v810, %v976
      %v1171 = vmul.f32 %v811, %v976
      %v1172 = vmul.f32 %v812, %v976
      %v1173 = vmul.f32 %v813, %v976
      %v1174 = vmul.f32 %v814, %v976
      %v1175 = vmul.f32 %v815, %v976
      %v1176 = vmul.f32 %v816, %v981
      %v1177 = vmul.f32 %v817, %v981
      %v1178 = vmul.f32 %v818, %v981
      %v1179 = vmul.f32 %v819, %v981
      %v1180 = vmul.f32 %v820, %v981
      %v1181 = vmul.f32 %v821, %v981
      %v1182 = vmul.f32 %v822, %v981
      %v1183 = vmul.f32 %v823, %v986
      %v1184 = vmul.f32 %v824, %v986
      %v1185 = vmul.f32 %v825, %v986
      %v1186 = vmul.f32 %v826, %v986
      %v1187 = vmul.f32 %v827, %v986
      %v1188 = vmul.f32 %v828, %v986
      %v1189 = vmul.f32 %v829, %v986
      %v1190 = vmul.f32 %v830, %v991
      %v1191 = vmul.f32 %v831, %v991
      %v1192 = vmul.f32 %v832, %v991
      %v1193 = vmul.f32 %v833, %v991
      %v1194 = vmul.f32 %v834, %v991
      %v1195 = vmul.f32 %v835, %v991
      %v1196 = vmul.f32 %v836, %v991
      %v1197 = vmul.f32 %v837, %v996
      %v1198 = vmul.f32 %v838, %v996
      %v1199 = vmul.f32 %v839, %v996
      %v1200 = vmul.f32 %v840, %v996
      %v1201 = vmul.f32 %v841, %v996
      %v1202 = vmul.f32 %v842, %v996
      %v1203 = vmul.f32 %v843, %v996
      %v1204 = vmul.f32 %v844, %v1001
      %v1205 = vmul.f32 %v845, %v1001
      %v1206 = vmul.f32 %v846, %v1001
      %v1207 = vmul.f32 %v847, %v1001
      %v1208 = vmul.f32 %v848, %v1001
      %v1209 = vmul.f32 %v849, %v1001
      %v1210 = vmul.f32 %v850, %v1001
      %v1211 = vmul.f32 %v851, %v1006
      %v1212 = vmul.f32 %v852, %v1006
      %v1213 = vmul.f32 %v853, %v1006
      %v1214 = vmul.f32 %v854, %v1006
      %v1215 = vmul.f32 %v855, %v1006
      %v1216 = vmul.f32 %v856, %v1006
      %v1217 = vmul.f32 %v857, %v1006
      %1218 = vst [vmem:[%s248] sm:$0xff] %v1008
      %1219 = vst [vmem:[%s248 + $0x8] sm:$0xff] %v1009
      %1220 = vst [vmem:[%s248 + $0x10] sm:$0xff] %v1010
      %1221 = vst [vmem:[%s248 + $0x18] sm:$0xff] %v1011
      %1222 = vst [vmem:[%s248 + $0x20] sm:$0xff] %v1012
      %1223 = vst [vmem:[%s248 + $0x28] sm:$0xff] %v1013
      %vm1224 = vcmask 130048
      %1225 = vst.msk [vmem:[%s248 + $0x30] sm:$0xff] %vm1224, %v1014
      %1226 = vst [vmem:[%s248 + $0x38] sm:$0xff] %v1015
      %1227 = vst [vmem:[%s248 + $0x40] sm:$0xff] %v1016
      %1228 = vst [vmem:[%s248 + $0x48] sm:$0xff] %v1017
      %1229 = vst [vmem:[%s248 + $0x50] sm:$0xff] %v1018
      %1230 = vst [vmem:[%s248 + $0x58] sm:$0xff] %v1019
      %1231 = vst [vmem:[%s248 + $0x60] sm:$0xff] %v1020
      %1232 = vst.msk [vmem:[%s248 + $0x68] sm:$0xff] %vm1224, %v1021
      %1233 = vst [vmem:[%s248 + $0x70] sm:$0xff] %v1022
      %1234 = vst [vmem:[%s248 + $0x78] sm:$0xff] %v1023
      %1235 = vst [vmem:[%s248 + $0x80] sm:$0xff] %v1024
      %1236 = vst [vmem:[%s248 + $0x88] sm:$0xff] %v1025
      %1237 = vst [vmem:[%s248 + $0x90] sm:$0xff] %v1026
      %1238 = vst [vmem:[%s248 + $0x98] sm:$0xff] %v1027
      %1239 = vst.msk [vmem:[%s248 + $0xa0] sm:$0xff] %vm1224, %v1028
      %1240 = vst [vmem:[%s248 + $0xa8] sm:$0xff] %v1029
      %1241 = vst [vmem:[%s248 + $0xb0] sm:$0xff] %v1030
      %1242 = vst [vmem:[%s248 + $0xb8] sm:$0xff] %v1031
      %1243 = vst [vmem:[%s248 + $0xc0] sm:$0xff] %v1032
      %1244 = vst [vmem:[%s248 + $0xc8] sm:$0xff] %v1033
      %1245 = vst [vmem:[%s248 + $0xd0] sm:$0xff] %v1034
      %1246 = vst.msk [vmem:[%s248 + $0xd8] sm:$0xff] %vm1224, %v1035
      %1247 = vst [vmem:[%s248 + $0xe0] sm:$0xff] %v1036
      %1248 = vst [vmem:[%s248 + $0xe8] sm:$0xff] %v1037
      %1249 = vst [vmem:[%s248 + $0xf0] sm:$0xff] %v1038
      %1250 = vst [vmem:[%s248 + $0xf8] sm:$0xff] %v1039
      %1251 = vst [vmem:[%s248 + $0x100] sm:$0xff] %v1040
      %1252 = vst [vmem:[%s248 + $0x108] sm:$0xff] %v1041
      %1253 = vst.msk [vmem:[%s248 + $0x110] sm:$0xff] %vm1224, %v1042
      %1254 = vst [vmem:[%s248 + $0x118] sm:$0xff] %v1043
      %1255 = vst [vmem:[%s248 + $0x120] sm:$0xff] %v1044
      %1256 = vst [vmem:[%s248 + $0x128] sm:$0xff] %v1045
      %1257 = vst [vmem:[%s248 + $0x130] sm:$0xff] %v1046
      %1258 = vst [vmem:[%s248 + $0x138] sm:$0xff] %v1047
      %1259 = vst [vmem:[%s248 + $0x140] sm:$0xff] %v1048
      %1260 = vst.msk [vmem:[%s248 + $0x148] sm:$0xff] %vm1224, %v1049
      %1261 = vst [vmem:[%s248 + $0x150] sm:$0xff] %v1050
      %1262 = vst [vmem:[%s248 + $0x158] sm:$0xff] %v1051
      %1263 = vst [vmem:[%s248 + $0x160] sm:$0xff] %v1052
      %1264 = vst [vmem:[%s248 + $0x168] sm:$0xff] %v1053
      %1265 = vst [vmem:[%s248 + $0x170] sm:$0xff] %v1054
      %1266 = vst [vmem:[%s248 + $0x178] sm:$0xff] %v1055
      %1267 = vst.msk [vmem:[%s248 + $0x180] sm:$0xff] %vm1224, %v1056
      %1268 = vst [vmem:[%s248 + $0x188] sm:$0xff] %v1057
      %1269 = vst [vmem:[%s248 + $0x190] sm:$0xff] %v1058
      %1270 = vst [vmem:[%s248 + $0x198] sm:$0xff] %v1059
      %1271 = vst [vmem:[%s248 + $0x1a0] sm:$0xff] %v1060
      %1272 = vst [vmem:[%s248 + $0x1a8] sm:$0xff] %v1061
      %1273 = vst [vmem:[%s248 + $0x1b0] sm:$0xff] %v1062
      %1274 = vst.msk [vmem:[%s248 + $0x1b8] sm:$0xff] %vm1224, %v1063
      %1275 = vst [vmem:[%s248 + $0x1c0] sm:$0xff] %v1064
      %1276 = vst [vmem:[%s248 + $0x1c8] sm:$0xff] %v1065
      %1277 = vst [vmem:[%s248 + $0x1d0] sm:$0xff] %v1066
      %1278 = vst [vmem:[%s248 + $0x1d8] sm:$0xff] %v1067
      %1279 = vst [vmem:[%s248 + $0x1e0] sm:$0xff] %v1068
      %1280 = vst [vmem:[%s248 + $0x1e8] sm:$0xff] %v1069
      %1281 = vst.msk [vmem:[%s248 + $0x1f0] sm:$0xff] %vm1224, %v1070
      %1282 = vst [vmem:[%s248 + $0x1f8] sm:$0xff] %v1071
      %1283 = vst [vmem:[%s248 + $0x200] sm:$0xff] %v1072
      %1284 = vst [vmem:[%s248 + $0x208] sm:$0xff] %v1073
      %1285 = vst [vmem:[%s248 + $0x210] sm:$0xff] %v1074
      %1286 = vst [vmem:[%s248 + $0x218] sm:$0xff] %v1075
      %1287 = vst [vmem:[%s248 + $0x220] sm:$0xff] %v1076
      %1288 = vst.msk [vmem:[%s248 + $0x228] sm:$0xff] %vm1224, %v1077
      %1289 = vst [vmem:[%s248 + $0x230] sm:$0xff] %v1078
      %1290 = vst [vmem:[%s248 + $0x238] sm:$0xff] %v1079
      %1291 = vst [vmem:[%s248 + $0x240] sm:$0xff] %v1080
      %1292 = vst [vmem:[%s248 + $0x248] sm:$0xff] %v1081
      %1293 = vst [vmem:[%s248 + $0x250] sm:$0xff] %v1082
      %1294 = vst [vmem:[%s248 + $0x258] sm:$0xff] %v1083
      %1295 = vst.msk [vmem:[%s248 + $0x260] sm:$0xff] %vm1224, %v1084
      %1296 = vst [vmem:[%s248 + $0x268] sm:$0xff] %v1085
      %1297 = vst [vmem:[%s248 + $0x270] sm:$0xff] %v1086
      %1298 = vst [vmem:[%s248 + $0x278] sm:$0xff] %v1087
      %1299 = vst [vmem:[%s248 + $0x280] sm:$0xff] %v1088
      %1300 = vst [vmem:[%s248 + $0x288] sm:$0xff] %v1089
      %1301 = vst [vmem:[%s248 + $0x290] sm:$0xff] %v1090
      %1302 = vst.msk [vmem:[%s248 + $0x298] sm:$0xff] %vm1224, %v1091
      %1303 = vst [vmem:[%s248 + $0x2a0] sm:$0xff] %v1092
      %1304 = vst [vmem:[%s248 + $0x2a8] sm:$0xff] %v1093
      %1305 = vst [vmem:[%s248 + $0x2b0] sm:$0xff] %v1094
      %1306 = vst [vmem:[%s248 + $0x2b8] sm:$0xff] %v1095
      %1307 = vst [vmem:[%s248 + $0x2c0] sm:$0xff] %v1096
      %1308 = vst [vmem:[%s248 + $0x2c8] sm:$0xff] %v1097
      %1309 = vst.msk [vmem:[%s248 + $0x2d0] sm:$0xff] %vm1224, %v1098
      %1310 = vst [vmem:[%s248 + $0x2d8] sm:$0xff] %v1099
      %1311 = vst [vmem:[%s248 + $0x2e0] sm:$0xff] %v1100
      %1312 = vst [vmem:[%s248 + $0x2e8] sm:$0xff] %v1101
      %1313 = vst [vmem:[%s248 + $0x2f0] sm:$0xff] %v1102
      %1314 = vst [vmem:[%s248 + $0x2f8] sm:$0xff] %v1103
      %1315 = vst [vmem:[%s248 + $0x300] sm:$0xff] %v1104
      %1316 = vst.msk [vmem:[%s248 + $0x308] sm:$0xff] %vm1224, %v1105
      %1317 = vst [vmem:[%s248 + $0x310] sm:$0xff] %v1106
      %1318 = vst [vmem:[%s248 + $0x318] sm:$0xff] %v1107
      %1319 = vst [vmem:[%s248 + $0x320] sm:$0xff] %v1108
      %1320 = vst [vmem:[%s248 + $0x328] sm:$0xff] %v1109
      %1321 = vst [vmem:[%s248 + $0x330] sm:$0xff] %v1110
      %1322 = vst [vmem:[%s248 + $0x338] sm:$0xff] %v1111
      %1323 = vst.msk [vmem:[%s248 + $0x340] sm:$0xff] %vm1224, %v1112
      %1324 = vst [vmem:[%s248 + $0x348] sm:$0xff] %v1113
      %1325 = vst [vmem:[%s248 + $0x350] sm:$0xff] %v1114
      %1326 = vst [vmem:[%s248 + $0x358] sm:$0xff] %v1115
      %1327 = vst [vmem:[%s248 + $0x360] sm:$0xff] %v1116
      %1328 = vst [vmem:[%s248 + $0x368] sm:$0xff] %v1117
      %1329 = vst [vmem:[%s248 + $0x370] sm:$0xff] %v1118
      %1330 = vst.msk [vmem:[%s248 + $0x378] sm:$0xff] %vm1224, %v1119
      %1331 = vst [vmem:[%s248 + $0x380] sm:$0xff] %v1120
      %1332 = vst [vmem:[%s248 + $0x388] sm:$0xff] %v1121
      %1333 = vst [vmem:[%s248 + $0x390] sm:$0xff] %v1122
      %1334 = vst [vmem:[%s248 + $0x398] sm:$0xff] %v1123
      %1335 = vst [vmem:[%s248 + $0x3a0] sm:$0xff] %v1124
      %1336 = vst [vmem:[%s248 + $0x3a8] sm:$0xff] %v1125
      %1337 = vst.msk [vmem:[%s248 + $0x3b0] sm:$0xff] %vm1224, %v1126
      %1338 = vst [vmem:[%s248 + $0x3b8] sm:$0xff] %v1127
      %1339 = vst [vmem:[%s248 + $0x3c0] sm:$0xff] %v1128
      %1340 = vst [vmem:[%s248 + $0x3c8] sm:$0xff] %v1129
      %1341 = vst [vmem:[%s248 + $0x3d0] sm:$0xff] %v1130
      %1342 = vst [vmem:[%s248 + $0x3d8] sm:$0xff] %v1131
      %1343 = vst [vmem:[%s248 + $0x3e0] sm:$0xff] %v1132
      %1344 = vst.msk [vmem:[%s248 + $0x3e8] sm:$0xff] %vm1224, %v1133
      %1345 = vst [vmem:[%s248 + $0x3f0] sm:$0xff] %v1134
      %1346 = vst [vmem:[%s248 + $0x3f8] sm:$0xff] %v1135
      %1347 = vst [vmem:[%s248 + $0x400] sm:$0xff] %v1136
      %1348 = vst [vmem:[%s248 + $0x408] sm:$0xff] %v1137
      %1349 = vst [vmem:[%s248 + $0x410] sm:$0xff] %v1138
      %1350 = vst [vmem:[%s248 + $0x418] sm:$0xff] %v1139
      %1351 = vst.msk [vmem:[%s248 + $0x420] sm:$0xff] %vm1224, %v1140
      %1352 = vst [vmem:[%s248 + $0x428] sm:$0xff] %v1141
      %1353 = vst [vmem:[%s248 + $0x430] sm:$0xff] %v1142
      %1354 = vst [vmem:[%s248 + $0x438] sm:$0xff] %v1143
      %1355 = vst [vmem:[%s248 + $0x440] sm:$0xff] %v1144
      %1356 = vst [vmem:[%s248 + $0x448] sm:$0xff] %v1145
      %1357 = vst [vmem:[%s248 + $0x450] sm:$0xff] %v1146
      %1358 = vst.msk [vmem:[%s248 + $0x458] sm:$0xff] %vm1224, %v1147
      %1359 = vst [vmem:[%s248 + $0x460] sm:$0xff] %v1148
      %1360 = vst [vmem:[%s248 + $0x468] sm:$0xff] %v1149
      %1361 = vst [vmem:[%s248 + $0x470] sm:$0xff] %v1150
      %1362 = vst [vmem:[%s248 + $0x478] sm:$0xff] %v1151
      %1363 = vst [vmem:[%s248 + $0x480] sm:$0xff] %v1152
      %1364 = vst [vmem:[%s248 + $0x488] sm:$0xff] %v1153
      %1365 = vst.msk [vmem:[%s248 + $0x490] sm:$0xff] %vm1224, %v1154
      %1366 = vst [vmem:[%s248 + $0x498] sm:$0xff] %v1155
      %1367 = vst [vmem:[%s248 + $0x4a0] sm:$0xff] %v1156
      %1368 = vst [vmem:[%s248 + $0x4a8] sm:$0xff] %v1157
      %1369 = vst [vmem:[%s248 + $0x4b0] sm:$0xff] %v1158
      %1370 = vst [vmem:[%s248 + $0x4b8] sm:$0xff] %v1159
      %1371 = vst [vmem:[%s248 + $0x4c0] sm:$0xff] %v1160
      %1372 = vst.msk [vmem:[%s248 + $0x4c8] sm:$0xff] %vm1224, %v1161
      %1373 = vst [vmem:[%s248 + $0x4d0] sm:$0xff] %v1162
      %1374 = vst [vmem:[%s248 + $0x4d8] sm:$0xff] %v1163
      %1375 = vst [vmem:[%s248 + $0x4e0] sm:$0xff] %v1164
      %1376 = vst [vmem:[%s248 + $0x4e8] sm:$0xff] %v1165
      %1377 = vst [vmem:[%s248 + $0x4f0] sm:$0xff] %v1166
      %1378 = vst [vmem:[%s248 + $0x4f8] sm:$0xff] %v1167
      %1379 = vst.msk [vmem:[%s248 + $0x500] sm:$0xff] %vm1224, %v1168
      %1380 = vst [vmem:[%s248 + $0x508] sm:$0xff] %v1169
      %1381 = vst [vmem:[%s248 + $0x510] sm:$0xff] %v1170
      %1382 = vst [vmem:[%s248 + $0x518] sm:$0xff] %v1171
      %1383 = vst [vmem:[%s248 + $0x520] sm:$0xff] %v1172
      %1384 = vst [vmem:[%s248 + $0x528] sm:$0xff] %v1173
      %1385 = vst [vmem:[%s248 + $0x530] sm:$0xff] %v1174
      %1386 = vst.msk [vmem:[%s248 + $0x538] sm:$0xff] %vm1224, %v1175
      %1387 = vst [vmem:[%s248 + $0x540] sm:$0xff] %v1176
      %1388 = vst [vmem:[%s248 + $0x548] sm:$0xff] %v1177
      %1389 = vst [vmem:[%s248 + $0x550] sm:$0xff] %v1178
      %1390 = vst [vmem:[%s248 + $0x558] sm:$0xff] %v1179
      %1391 = vst [vmem:[%s248 + $0x560] sm:$0xff] %v1180
      %1392 = vst [vmem:[%s248 + $0x568] sm:$0xff] %v1181
      %1393 = vst.msk [vmem:[%s248 + $0x570] sm:$0xff] %vm1224, %v1182
      %1394 = vst [vmem:[%s248 + $0x578] sm:$0xff] %v1183
      %1395 = vst [vmem:[%s248 + $0x580] sm:$0xff] %v1184
      %1396 = vst [vmem:[%s248 + $0x588] sm:$0xff] %v1185
      %1397 = vst [vmem:[%s248 + $0x590] sm:$0xff] %v1186
      %1398 = vst [vmem:[%s248 + $0x598] sm:$0xff] %v1187
      %1399 = vst [vmem:[%s248 + $0x5a0] sm:$0xff] %v1188
      %1400 = vst.msk [vmem:[%s248 + $0x5a8] sm:$0xff] %vm1224, %v1189
      %1401 = vst [vmem:[%s248 + $0x5b0] sm:$0xff] %v1190
      %1402 = vst [vmem:[%s248 + $0x5b8] sm:$0xff] %v1191
      %1403 = vst [vmem:[%s248 + $0x5c0] sm:$0xff] %v1192
      %1404 = vst [vmem:[%s248 + $0x5c8] sm:$0xff] %v1193
      %1405 = vst [vmem:[%s248 + $0x5d0] sm:$0xff] %v1194
      %1406 = vst [vmem:[%s248 + $0x5d8] sm:$0xff] %v1195
      %1407 = vst.msk [vmem:[%s248 + $0x5e0] sm:$0xff] %vm1224, %v1196
      %1408 = vst [vmem:[%s248 + $0x5e8] sm:$0xff] %v1197
      %1409 = vst [vmem:[%s248 + $0x5f0] sm:$0xff] %v1198
      %1410 = vst [vmem:[%s248 + $0x5f8] sm:$0xff] %v1199
      %1411 = vst [vmem:[%s248 + $0x600] sm:$0xff] %v1200
      %1412 = vst [vmem:[%s248 + $0x608] sm:$0xff] %v1201
      %1413 = vst [vmem:[%s248 + $0x610] sm:$0xff] %v1202
      %1414 = vst.msk [vmem:[%s248 + $0x618] sm:$0xff] %vm1224, %v1203
      %1415 = vst [vmem:[%s248 + $0x620] sm:$0xff] %v1204
      %1416 = vst [vmem:[%s248 + $0x628] sm:$0xff] %v1205
      %1417 = vst [vmem:[%s248 + $0x630] sm:$0xff] %v1206
      %1418 = vst [vmem:[%s248 + $0x638] sm:$0xff] %v1207
      %1419 = vst [vmem:[%s248 + $0x640] sm:$0xff] %v1208
      %1420 = vst [vmem:[%s248 + $0x648] sm:$0xff] %v1209
      %1421 = vst.msk [vmem:[%s248 + $0x650] sm:$0xff] %vm1224, %v1210
      %1422 = vst [vmem:[%s248 + $0x658] sm:$0xff] %v1211
      %1423 = vst [vmem:[%s248 + $0x660] sm:$0xff] %v1212
      %1424 = vst [vmem:[%s248 + $0x668] sm:$0xff] %v1213
      %1425 = vst [vmem:[%s248 + $0x670] sm:$0xff] %v1214
      %1426 = vst [vmem:[%s248 + $0x678] sm:$0xff] %v1215
      %1427 = vst [vmem:[%s248 + $0x680] sm:$0xff] %v1216
      %1428 = vst.msk [vmem:[%s248 + $0x688] sm:$0xff] %vm1224, %v1217
      %s1429 = smul.u32 30, %s15
      %p1430 = scmp.lt.s32.totalorder %s1429, 59
      %s1431 = scalar_select %p1430, %s1429, 59
      %s1432 = smul.addr %s1431, 7
      %s1433 = smul.addr %s1432, 8
      %s1434 = scalar_lea.vmem %s4, %s1433
      // Predicated region
      $region37: #{tpu_custom_call.1} parent=35 // pred_check
        %p1435 = pneg %p132
      $region38: #{tpu_custom_call.1} parent=35 // pred_check_branch
        %1437 = sbr.rel (%p1435) target = $region40
      $region39: #{tpu_custom_call.1} parent=35 // pred_region
        %s1438 = smul.u32 30, %s15
      $region40: #{tpu_custom_call.1} parent=35 // pred_fallthru
        _
    $region36: #{tpu_custom_call.1} parent=5 // pred_fallthru
      _
    %p1439 = scmp.le.s32.totalorder 2, %s10
    // Predicated region
    $region41: #{tpu_custom_call.1} parent=5 // pred_check
      %p1440 = pneg %p1439
    $region42: #{tpu_custom_call.1} parent=5 // pred_check_branch
      %1442 = sbr.rel (%p1440) target = $region44
    $region43: #{tpu_custom_call.1} parent=5 // pred_region
      %s1443 = ssub.s32 %s10, 2
      // Predicated region
      $region45: #{tpu_custom_call.1} parent=43 // pred_check
        %p1444 = pneg %p138
      $region46: #{tpu_custom_call.1} parent=43 // pred_check_branch
        %1446 = sbr.rel (%p1444) target = $region48
      $region47: #{tpu_custom_call.1} parent=43 // pred_region
        %s1447 = smul.u32 30, %s16
        %p1448 = scmp.lt.s32.totalorder %s1447, 59
        %s1449 = scalar_select %p1448, %s1447, 59
        %s1450 = smul.addr %s1449, 7
        %s1451 = smul.addr %s1450, 8
        %s1452 = scalar_lea.vmem %s4, %s1451
      $region48: #{tpu_custom_call.1} parent=43 // pred_fallthru
        _
    $region44: #{tpu_custom_call.1} parent=5 // pred_fallthru
      _
  $region6: #{tpu_custom_call.1} parent=0 // loop_footer
    %s14 = sadd.s32 1, %s10
  $region7: #{tpu_custom_call.1} parent=0 // loop_footer_branch
    %9 = sbr.rel target = $region3
  $region8: #{tpu_custom_call.1} parent=0 // loop_exit
    _

</llo_original>
